<compile_context>
chip_gen: v6e
topology: v6e:2x2x1
jax: 0.10.0
libtpu: 0.0.40
codegen_flags: <defaults>
</compile_context>

<pallas_src>
import functools

import jax
import jax.numpy as jnp
from jax import lax
from jax.experimental import pallas as pl
from jax.experimental.pallas import tpu as pltpu

IN_F, HID_F, OUT_F = 10, 5, 2
LANE = 128


def _round_up(n, m):
    return ((n + m - 1) // m) * m


def _mlp_kernel(x_ref, w1_ref, b1_ref, w2_ref, b2_ref, o_ref, *, sub):
    # x_ref : (10, nbt, 128) VMEM block -- batch packed as (lane-groups, 128 lanes),
    #         so each feature row is a *dense* 2-D slab (no sublane waste).
    # w1_ref (5,10), b1_ref (5,), w2_ref (2,5), b2_ref (2,): SMEM (PyTorch layouts).
    # o_ref : (2, nbt, 128) VMEM block.
    nbt = x_ref.shape[1]
    n_sub = nbt // sub

    # Hoist every weight/bias scalar out of the chunk loop (cheap sld; avoids re-issuing
    # ~70 SMEM reads / broadcasts per chunk).
    w1s = [[w1_ref[j, k] for k in range(IN_F)] for j in range(HID_F)]
    b1s = [b1_ref[j] for j in range(HID_F)]
    w2s = [[w2_ref[i, j] for j in range(HID_F)] for i in range(OUT_F)]
    b2s = [b2_ref[i] for i in range(OUT_F)]

    def chunk_body(s, carry):
        start = pl.multiple_of(s * sub, sub)
        rows = pl.ds(start, sub)

        # Layer 1: h_j = relu(sum_k w1[j,k] * x_k + b1[j]) as scalar-x-vector MACs.
        # Loop k outer so each x slab is loaded exactly once and live vregs stay small.
        h = [None] * HID_F
        for k in range(IN_F):
            xk = x_ref[k, rows, :].astype(jnp.float32)   # dense (sub,128) f32 slab
            for j in range(HID_F):
                t = w1s[j][k] * xk
                h[j] = t if k == 0 else h[j] + t
        for j in range(HID_F):
            h[j] = jnp.maximum(h[j] + b1s[j], 0.0)

        # Layer 2: y_i = sum_j w2[i,j] * h_j + b2[i]; lane-dense stores.
        for i in range(OUT_F):
            acc = w2s[i][0] * h[0]
            for j in range(1, HID_F):
                acc = acc + w2s[i][j] * h[j]
            o_ref[i, rows, :] = (acc + b2s[i]).astype(o_ref.dtype)
        return carry

    lax.fori_loop(0, n_sub, chunk_body, None, unroll=True)


def _pick_nbt(NB, cap=256):
    """Lane-groups (of 128 rows) per grid step.

    Targets >= ~0.5-1 MiB of x per step at large B (cap=256 -> 1.25 MiB f32) while keeping
    >= 2 grid steps when possible so v7x's two TensorCores both get work.  Granule 16 keeps
    blocks legal for both f32 (8,128) and bf16 (16,128) tiling.
    """
    if NB < 16:
        return NB                      # single (possibly sub-128-group) block
    g = 16
    half = -(-NB // 2)                 # cdiv(NB, 2)
    nbt = _round_up(half, g)
    nbt = min(cap, nbt, (NB // g) * g)
    return max(nbt, g)


def toy_mlp_tposed(xT, w1, b1, w2, b2, *, out_dtype=jnp.float32, nbt_cap=256):
    """Fast path. xT: (10, B) with B % 128 == 0 -> (2, B).

    Zero layout copies: the only wrapper ops are free row-major reshapes.  Producers that
    can emit activations feature-major (and consumers that take (2, B)) pay exactly one
    HBM read of x and one write of y.  x may be float32 or bfloat16 (f32 accumulate).
    """
    F, B = xT.shape
    assert F == IN_F
    assert B % LANE == 0, (
        "toy_mlp_tposed wants batch % 128 == 0; use toy_model_forward for ragged batches")
    NB = B // LANE
    nbt = _pick_nbt(NB, nbt_cap)
    if nbt % 32 == 0:
        sub = 32
    elif nbt % 16 == 0:
        sub = 16
    elif nbt % 8 == 0:
        sub = 8
    else:
        sub = nbt

    xr = xT.reshape(IN_F, NB, LANE)            # free: metadata-only reshape
    w1 = w1.astype(jnp.float32)
    b1 = b1.astype(jnp.float32)
    w2 = w2.astype(jnp.float32)
    b2 = b2.astype(jnp.float32)

    grid = (pl.cdiv(NB, nbt),)                 # partial last block clipped by Pallas; no pad
    smem = pl.BlockSpec(memory_space=pltpu.MemorySpace.SMEM)

    out = pl.pallas_call(
        functools.partial(_mlp_kernel, sub=sub),
        out_shape=jax.ShapeDtypeStruct((OUT_F, NB, LANE), out_dtype),
        grid=grid,
        in_specs=[
            # Streamed activations: one (10, nbt, 128) slab per step, double-buffered.
            pl.BlockSpec((IN_F, nbt, LANE), lambda i: (0, i, 0)),
            # Tiny parameters: scalars in SMEM for scalar-x-vector MACs (no broadcasts).
            smem, smem, smem, smem,
        ],
        out_specs=pl.BlockSpec((OUT_F, nbt, LANE), lambda i: (0, i, 0)),
        compiler_params=pltpu.CompilerParams(
            dimension_semantics=("parallel",),       # independent batch tiles (v7x 2 TCs)
            vmem_limit_bytes=32 * 1024 * 1024,       # explicit scoped limit (v7x headroom)
        ),
    )(xr, w1, b1, w2, b2)

    return out.reshape(OUT_F, B)               # free reshape back to (2, B)


def toy_model_forward(x, w1, b1, w2, b2, *, out_dtype=jnp.float32):
    """PyTorch-layout entry: x (B, 10) -> (B, 2), matching ToyModel.forward.

    NOTE: the x.T / out.T (and the pad for B % 128 != 0) are XLA copies, i.e. extra HBM
    passes over a memory-bound op.  Production callers should produce activations in
    (10, B) layout (B a multiple of 128) and call toy_mlp_tposed directly.
    """
    B, F = x.shape
    assert F == IN_F
    Bp = _round_up(max(B, LANE), LANE)
    xT = x.T                                    # layout plumbing only
    if Bp != B:
        xT = jnp.pad(xT, ((0, 0), (0, Bp - B)))
    yT = toy_mlp_tposed(xT, w1, b1, w2, b2, out_dtype=out_dtype)
    return yT[:, :B].T


def init_params(key):
    """Same 1/sqrt(fan_in) bounds and (out,in)/(out,) layouts as PyTorch's default
    nn.Linear init (different RNG, so not bit-identical to a torch checkpoint)."""
    k1, k2, k3, k4 = jax.random.split(key, 4)
    bnd1 = 1.0 / jnp.sqrt(10.0)
    bnd2 = 1.0 / jnp.sqrt(5.0)
    w1 = jax.random.uniform(k1, (HID_F, IN_F), jnp.float32, -bnd1, bnd1)
    b1 = jax.random.uniform(k2, (HID_F,), jnp.float32, -bnd1, bnd1)
    w2 = jax.random.uniform(k3, (OUT_F, HID_F), jnp.float32, -bnd2, bnd2)
    b2 = jax.random.uniform(k4, (OUT_F,), jnp.float32, -bnd2, bnd2)
    return w1, b1, w2, b2


if __name__ == "__main__":
    key = jax.random.PRNGKey(0)
    kx, kp = jax.random.split(key)

    # Small batch that still exercises the tiled path: B=2560 -> 20 lane-groups ->
    # nbt=16 -> a 2-step grid whose second block is partial (clipped, no padding).
    B = 2560
    x = jax.random.normal(kx, (B, IN_F), jnp.float32)
    w1, b1, w2, b2 = init_params(kp)

    # Pure-JAX reference with PyTorch semantics, exact f32 (no MXU precision surprises).
    h_ref = jnp.maximum((x[:, None, :] * w1[None, :, :]).sum(-1) + b1, 0.0)
    ref = (h_ref[:, None, :] * w2[None, :, :]).sum(-1) + b2

    # 1) PyTorch-layout compatibility wrapper.
    fwd = jax.jit(lambda xx: toy_model_forward(xx, w1, b1, w2, b2))
    out = fwd(x)
    jax.block_until_ready(out)
    assert out.shape == (B, OUT_F)
    assert jnp.allclose(out, ref, atol=1e-4, rtol=1e-4)

    # 2) Production fast path: producer hands (10, B) bf16 activations (halves the HBM
    #    read on v6e/v7x); kernel accumulates in f32 and returns (2, B).
    xT_bf16 = x.T.astype(jnp.bfloat16)
    fwd_t = jax.jit(lambda xt: toy_mlp_tposed(xt, w1, b1, w2, b2))
    out_t = fwd_t(xT_bf16)
    jax.block_until_ready(out_t)
    assert out_t.shape == (OUT_F, B)
    assert jnp.allclose(out_t.T, ref, atol=5e-2, rtol=5e-2)

    print("KERNEL_OK")
</pallas_src>

<mosaic_0001>
module attributes {stable_mosaic.version = 11 : i64} {
  func.func @_mlp_kernel(%arg0: i32, %arg1: memref<10x16x128xf32, #tpu.memory_space<vmem>>, %arg2: memref<5x10xf32, #tpu.memory_space<smem>>, %arg3: memref<5xf32, #tpu.memory_space<smem>>, %arg4: memref<2x5xf32, #tpu.memory_space<smem>>, %arg5: memref<2xf32, #tpu.memory_space<smem>>, %arg6: memref<2x16x128xf32, #tpu.memory_space<vmem>>) attributes {dimension_semantics = [#tpu.dimension_semantics<parallel>], iteration_bounds = array<i64: 2>, scalar_prefetch = 0 : i64, scratch_operands = 0 : i64, tpu.core_type = #tpu.core_type<tc>, window_params = [{transform_indices = @transform_0, window_bounds = array<i64: 10, 16, 128>}, {transform_indices = @transform_1, window_bounds = array<i64: 5, 10>}, {transform_indices = @transform_2, window_bounds = array<i64: 5>}, {transform_indices = @transform_3, window_bounds = array<i64: 2, 5>}, {transform_indices = @transform_4, window_bounds = array<i64: 2>}, {transform_indices = @transform_5, window_bounds = array<i64: 2, 16, 128>}]} {
    %c0 = arith.constant 0 : index
    %c0_0 = arith.constant 0 : index
    %0 = memref.load %arg2[%c0, %c0_0] : memref<5x10xf32, #tpu.memory_space<smem>>
    %c0_1 = arith.constant 0 : index
    %c1 = arith.constant 1 : index
    %1 = memref.load %arg2[%c0_1, %c1] : memref<5x10xf32, #tpu.memory_space<smem>>
    %c0_2 = arith.constant 0 : index
    %c2 = arith.constant 2 : index
    %2 = memref.load %arg2[%c0_2, %c2] : memref<5x10xf32, #tpu.memory_space<smem>>
    %c0_3 = arith.constant 0 : index
    %c3 = arith.constant 3 : index
    %3 = memref.load %arg2[%c0_3, %c3] : memref<5x10xf32, #tpu.memory_space<smem>>
    %c0_4 = arith.constant 0 : index
    %c4 = arith.constant 4 : index
    %4 = memref.load %arg2[%c0_4, %c4] : memref<5x10xf32, #tpu.memory_space<smem>>
    %c0_5 = arith.constant 0 : index
    %c5 = arith.constant 5 : index
    %5 = memref.load %arg2[%c0_5, %c5] : memref<5x10xf32, #tpu.memory_space<smem>>
    %c0_6 = arith.constant 0 : index
    %c6 = arith.constant 6 : index
    %6 = memref.load %arg2[%c0_6, %c6] : memref<5x10xf32, #tpu.memory_space<smem>>
    %c0_7 = arith.constant 0 : index
    %c7 = arith.constant 7 : index
    %7 = memref.load %arg2[%c0_7, %c7] : memref<5x10xf32, #tpu.memory_space<smem>>
    %c0_8 = arith.constant 0 : index
    %c8 = arith.constant 8 : index
    %8 = memref.load %arg2[%c0_8, %c8] : memref<5x10xf32, #tpu.memory_space<smem>>
    %c0_9 = arith.constant 0 : index
    %c9 = arith.constant 9 : index
    %9 = memref.load %arg2[%c0_9, %c9] : memref<5x10xf32, #tpu.memory_space<smem>>
    %c1_10 = arith.constant 1 : index
    %c0_11 = arith.constant 0 : index
    %10 = memref.load %arg2[%c1_10, %c0_11] : memref<5x10xf32, #tpu.memory_space<smem>>
    %c1_12 = arith.constant 1 : index
    %c1_13 = arith.constant 1 : index
    %11 = memref.load %arg2[%c1_12, %c1_13] : memref<5x10xf32, #tpu.memory_space<smem>>
    %c1_14 = arith.constant 1 : index
    %c2_15 = arith.constant 2 : index
    %12 = memref.load %arg2[%c1_14, %c2_15] : memref<5x10xf32, #tpu.memory_space<smem>>
    %c1_16 = arith.constant 1 : index
    %c3_17 = arith.constant 3 : index
    %13 = memref.load %arg2[%c1_16, %c3_17] : memref<5x10xf32, #tpu.memory_space<smem>>
    %c1_18 = arith.constant 1 : index
    %c4_19 = arith.constant 4 : index
    %14 = memref.load %arg2[%c1_18, %c4_19] : memref<5x10xf32, #tpu.memory_space<smem>>
    %c1_20 = arith.constant 1 : index
    %c5_21 = arith.constant 5 : index
    %15 = memref.load %arg2[%c1_20, %c5_21] : memref<5x10xf32, #tpu.memory_space<smem>>
    %c1_22 = arith.constant 1 : index
    %c6_23 = arith.constant 6 : index
    %16 = memref.load %arg2[%c1_22, %c6_23] : memref<5x10xf32, #tpu.memory_space<smem>>
    %c1_24 = arith.constant 1 : index
    %c7_25 = arith.constant 7 : index
    %17 = memref.load %arg2[%c1_24, %c7_25] : memref<5x10xf32, #tpu.memory_space<smem>>
    %c1_26 = arith.constant 1 : index
    %c8_27 = arith.constant 8 : index
    %18 = memref.load %arg2[%c1_26, %c8_27] : memref<5x10xf32, #tpu.memory_space<smem>>
    %c1_28 = arith.constant 1 : index
    %c9_29 = arith.constant 9 : index
    %19 = memref.load %arg2[%c1_28, %c9_29] : memref<5x10xf32, #tpu.memory_space<smem>>
    %c2_30 = arith.constant 2 : index
    %c0_31 = arith.constant 0 : index
    %20 = memref.load %arg2[%c2_30, %c0_31] : memref<5x10xf32, #tpu.memory_space<smem>>
    %c2_32 = arith.constant 2 : index
    %c1_33 = arith.constant 1 : index
    %21 = memref.load %arg2[%c2_32, %c1_33] : memref<5x10xf32, #tpu.memory_space<smem>>
    %c2_34 = arith.constant 2 : index
    %c2_35 = arith.constant 2 : index
    %22 = memref.load %arg2[%c2_34, %c2_35] : memref<5x10xf32, #tpu.memory_space<smem>>
    %c2_36 = arith.constant 2 : index
    %c3_37 = arith.constant 3 : index
    %23 = memref.load %arg2[%c2_36, %c3_37] : memref<5x10xf32, #tpu.memory_space<smem>>
    %c2_38 = arith.constant 2 : index
    %c4_39 = arith.constant 4 : index
    %24 = memref.load %arg2[%c2_38, %c4_39] : memref<5x10xf32, #tpu.memory_space<smem>>
    %c2_40 = arith.constant 2 : index
    %c5_41 = arith.constant 5 : index
    %25 = memref.load %arg2[%c2_40, %c5_41] : memref<5x10xf32, #tpu.memory_space<smem>>
    %c2_42 = arith.constant 2 : index
    %c6_43 = arith.constant 6 : index
    %26 = memref.load %arg2[%c2_42, %c6_43] : memref<5x10xf32, #tpu.memory_space<smem>>
    %c2_44 = arith.constant 2 : index
    %c7_45 = arith.constant 7 : index
    %27 = memref.load %arg2[%c2_44, %c7_45] : memref<5x10xf32, #tpu.memory_space<smem>>
    %c2_46 = arith.constant 2 : index
    %c8_47 = arith.constant 8 : index
    %28 = memref.load %arg2[%c2_46, %c8_47] : memref<5x10xf32, #tpu.memory_space<smem>>
    %c2_48 = arith.constant 2 : index
    %c9_49 = arith.constant 9 : index
    %29 = memref.load %arg2[%c2_48, %c9_49] : memref<5x10xf32, #tpu.memory_space<smem>>
    %c3_50 = arith.constant 3 : index
    %c0_51 = arith.constant 0 : index
    %30 = memref.load %arg2[%c3_50, %c0_51] : memref<5x10xf32, #tpu.memory_space<smem>>
    %c3_52 = arith.constant 3 : index
    %c1_53 = arith.constant 1 : index
    %31 = memref.load %arg2[%c3_52, %c1_53] : memref<5x10xf32, #tpu.memory_space<smem>>
    %c3_54 = arith.constant 3 : index
    %c2_55 = arith.constant 2 : index
    %32 = memref.load %arg2[%c3_54, %c2_55] : memref<5x10xf32, #tpu.memory_space<smem>>
    %c3_56 = arith.constant 3 : index
    %c3_57 = arith.constant 3 : index
    %33 = memref.load %arg2[%c3_56, %c3_57] : memref<5x10xf32, #tpu.memory_space<smem>>
    %c3_58 = arith.constant 3 : index
    %c4_59 = arith.constant 4 : index
    %34 = memref.load %arg2[%c3_58, %c4_59] : memref<5x10xf32, #tpu.memory_space<smem>>
    %c3_60 = arith.constant 3 : index
    %c5_61 = arith.constant 5 : index
    %35 = memref.load %arg2[%c3_60, %c5_61] : memref<5x10xf32, #tpu.memory_space<smem>>
    %c3_62 = arith.constant 3 : index
    %c6_63 = arith.constant 6 : index
    %36 = memref.load %arg2[%c3_62, %c6_63] : memref<5x10xf32, #tpu.memory_space<smem>>
    %c3_64 = arith.constant 3 : index
    %c7_65 = arith.constant 7 : index
    %37 = memref.load %arg2[%c3_64, %c7_65] : memref<5x10xf32, #tpu.memory_space<smem>>
    %c3_66 = arith.constant 3 : index
    %c8_67 = arith.constant 8 : index
    %38 = memref.load %arg2[%c3_66, %c8_67] : memref<5x10xf32, #tpu.memory_space<smem>>
    %c3_68 = arith.constant 3 : index
    %c9_69 = arith.constant 9 : index
    %39 = memref.load %arg2[%c3_68, %c9_69] : memref<5x10xf32, #tpu.memory_space<smem>>
    %c4_70 = arith.constant 4 : index
    %c0_71 = arith.constant 0 : index
    %40 = memref.load %arg2[%c4_70, %c0_71] : memref<5x10xf32, #tpu.memory_space<smem>>
    %c4_72 = arith.constant 4 : index
    %c1_73 = arith.constant 1 : index
    %41 = memref.load %arg2[%c4_72, %c1_73] : memref<5x10xf32, #tpu.memory_space<smem>>
    %c4_74 = arith.constant 4 : index
    %c2_75 = arith.constant 2 : index
    %42 = memref.load %arg2[%c4_74, %c2_75] : memref<5x10xf32, #tpu.memory_space<smem>>
    %c4_76 = arith.constant 4 : index
    %c3_77 = arith.constant 3 : index
    %43 = memref.load %arg2[%c4_76, %c3_77] : memref<5x10xf32, #tpu.memory_space<smem>>
    %c4_78 = arith.constant 4 : index
    %c4_79 = arith.constant 4 : index
    %44 = memref.load %arg2[%c4_78, %c4_79] : memref<5x10xf32, #tpu.memory_space<smem>>
    %c4_80 = arith.constant 4 : index
    %c5_81 = arith.constant 5 : index
    %45 = memref.load %arg2[%c4_80, %c5_81] : memref<5x10xf32, #tpu.memory_space<smem>>
    %c4_82 = arith.constant 4 : index
    %c6_83 = arith.constant 6 : index
    %46 = memref.load %arg2[%c4_82, %c6_83] : memref<5x10xf32, #tpu.memory_space<smem>>
    %c4_84 = arith.constant 4 : index
    %c7_85 = arith.constant 7 : index
    %47 = memref.load %arg2[%c4_84, %c7_85] : memref<5x10xf32, #tpu.memory_space<smem>>
    %c4_86 = arith.constant 4 : index
    %c8_87 = arith.constant 8 : index
    %48 = memref.load %arg2[%c4_86, %c8_87] : memref<5x10xf32, #tpu.memory_space<smem>>
    %c4_88 = arith.constant 4 : index
    %c9_89 = arith.constant 9 : index
    %49 = memref.load %arg2[%c4_88, %c9_89] : memref<5x10xf32, #tpu.memory_space<smem>>
    %c0_90 = arith.constant 0 : index
    %50 = memref.load %arg3[%c0_90] : memref<5xf32, #tpu.memory_space<smem>>
    %c1_91 = arith.constant 1 : index
    %51 = memref.load %arg3[%c1_91] : memref<5xf32, #tpu.memory_space<smem>>
    %c2_92 = arith.constant 2 : index
    %52 = memref.load %arg3[%c2_92] : memref<5xf32, #tpu.memory_space<smem>>
    %c3_93 = arith.constant 3 : index
    %53 = memref.load %arg3[%c3_93] : memref<5xf32, #tpu.memory_space<smem>>
    %c4_94 = arith.constant 4 : index
    %54 = memref.load %arg3[%c4_94] : memref<5xf32, #tpu.memory_space<smem>>
    %c0_95 = arith.constant 0 : index
    %c0_96 = arith.constant 0 : index
    %55 = memref.load %arg4[%c0_95, %c0_96] : memref<2x5xf32, #tpu.memory_space<smem>>
    %c0_97 = arith.constant 0 : index
    %c1_98 = arith.constant 1 : index
    %56 = memref.load %arg4[%c0_97, %c1_98] : memref<2x5xf32, #tpu.memory_space<smem>>
    %c0_99 = arith.constant 0 : index
    %c2_100 = arith.constant 2 : index
    %57 = memref.load %arg4[%c0_99, %c2_100] : memref<2x5xf32, #tpu.memory_space<smem>>
    %c0_101 = arith.constant 0 : index
    %c3_102 = arith.constant 3 : index
    %58 = memref.load %arg4[%c0_101, %c3_102] : memref<2x5xf32, #tpu.memory_space<smem>>
    %c0_103 = arith.constant 0 : index
    %c4_104 = arith.constant 4 : index
    %59 = memref.load %arg4[%c0_103, %c4_104] : memref<2x5xf32, #tpu.memory_space<smem>>
    %c1_105 = arith.constant 1 : index
    %c0_106 = arith.constant 0 : index
    %60 = memref.load %arg4[%c1_105, %c0_106] : memref<2x5xf32, #tpu.memory_space<smem>>
    %c1_107 = arith.constant 1 : index
    %c1_108 = arith.constant 1 : index
    %61 = memref.load %arg4[%c1_107, %c1_108] : memref<2x5xf32, #tpu.memory_space<smem>>
    %c1_109 = arith.constant 1 : index
    %c2_110 = arith.constant 2 : index
    %62 = memref.load %arg4[%c1_109, %c2_110] : memref<2x5xf32, #tpu.memory_space<smem>>
    %c1_111 = arith.constant 1 : index
    %c3_112 = arith.constant 3 : index
    %63 = memref.load %arg4[%c1_111, %c3_112] : memref<2x5xf32, #tpu.memory_space<smem>>
    %c1_113 = arith.constant 1 : index
    %c4_114 = arith.constant 4 : index
    %64 = memref.load %arg4[%c1_113, %c4_114] : memref<2x5xf32, #tpu.memory_space<smem>>
    %c0_115 = arith.constant 0 : index
    %65 = memref.load %arg5[%c0_115] : memref<2xf32, #tpu.memory_space<smem>>
    %c1_116 = arith.constant 1 : index
    %66 = memref.load %arg5[%c1_116] : memref<2xf32, #tpu.memory_space<smem>>
    %c0_i32 = arith.constant 0 : i32
    %c16_i32 = arith.constant 16 : i32
    %67 = arith.muli %c0_i32, %c16_i32 : i32
    %68 = tpu.assume_multiple %67, 16 : i32
    %c0_117 = arith.constant 0 : index
    %69 = arith.index_cast %68 : i32 to index
    %c0_118 = arith.constant 0 : index
    %70 = vector.load %arg1[%c0_117, %69, %c0_118] : memref<10x16x128xf32, #tpu.memory_space<vmem>>, vector<1x16x128xf32>
    %71 = vector.shape_cast %70 : vector<1x16x128xf32> to vector<16x128xf32>
    %72 = vector.broadcast %0 : f32 to vector<16x128xf32>
    %73 = arith.mulf %72, %71 : vector<16x128xf32>
    %74 = vector.broadcast %10 : f32 to vector<16x128xf32>
    %75 = arith.mulf %74, %71 : vector<16x128xf32>
    %76 = vector.broadcast %20 : f32 to vector<16x128xf32>
    %77 = arith.mulf %76, %71 : vector<16x128xf32>
    %78 = vector.broadcast %30 : f32 to vector<16x128xf32>
    %79 = arith.mulf %78, %71 : vector<16x128xf32>
    %80 = vector.broadcast %40 : f32 to vector<16x128xf32>
    %81 = arith.mulf %80, %71 : vector<16x128xf32>
    %c1_119 = arith.constant 1 : index
    %82 = arith.index_cast %68 : i32 to index
    %c0_120 = arith.constant 0 : index
    %83 = vector.load %arg1[%c1_119, %82, %c0_120] : memref<10x16x128xf32, #tpu.memory_space<vmem>>, vector<1x16x128xf32>
    %84 = vector.shape_cast %83 : vector<1x16x128xf32> to vector<16x128xf32>
    %85 = vector.broadcast %1 : f32 to vector<16x128xf32>
    %86 = arith.mulf %85, %84 : vector<16x128xf32>
    %87 = arith.addf %73, %86 : vector<16x128xf32>
    %88 = vector.broadcast %11 : f32 to vector<16x128xf32>
    %89 = arith.mulf %88, %84 : vector<16x128xf32>
    %90 = arith.addf %75, %89 : vector<16x128xf32>
    %91 = vector.broadcast %21 : f32 to vector<16x128xf32>
    %92 = arith.mulf %91, %84 : vector<16x128xf32>
    %93 = arith.addf %77, %92 : vector<16x128xf32>
    %94 = vector.broadcast %31 : f32 to vector<16x128xf32>
    %95 = arith.mulf %94, %84 : vector<16x128xf32>
    %96 = arith.addf %79, %95 : vector<16x128xf32>
    %97 = vector.broadcast %41 : f32 to vector<16x128xf32>
    %98 = arith.mulf %97, %84 : vector<16x128xf32>
    %99 = arith.addf %81, %98 : vector<16x128xf32>
    %c2_121 = arith.constant 2 : index
    %100 = arith.index_cast %68 : i32 to index
    %c0_122 = arith.constant 0 : index
    %101 = vector.load %arg1[%c2_121, %100, %c0_122] : memref<10x16x128xf32, #tpu.memory_space<vmem>>, vector<1x16x128xf32>
    %102 = vector.shape_cast %101 : vector<1x16x128xf32> to vector<16x128xf32>
    %103 = vector.broadcast %2 : f32 to vector<16x128xf32>
    %104 = arith.mulf %103, %102 : vector<16x128xf32>
    %105 = arith.addf %87, %104 : vector<16x128xf32>
    %106 = vector.broadcast %12 : f32 to vector<16x128xf32>
    %107 = arith.mulf %106, %102 : vector<16x128xf32>
    %108 = arith.addf %90, %107 : vector<16x128xf32>
    %109 = vector.broadcast %22 : f32 to vector<16x128xf32>
    %110 = arith.mulf %109, %102 : vector<16x128xf32>
    %111 = arith.addf %93, %110 : vector<16x128xf32>
    %112 = vector.broadcast %32 : f32 to vector<16x128xf32>
    %113 = arith.mulf %112, %102 : vector<16x128xf32>
    %114 = arith.addf %96, %113 : vector<16x128xf32>
    %115 = vector.broadcast %42 : f32 to vector<16x128xf32>
    %116 = arith.mulf %115, %102 : vector<16x128xf32>
    %117 = arith.addf %99, %116 : vector<16x128xf32>
    %c3_123 = arith.constant 3 : index
    %118 = arith.index_cast %68 : i32 to index
    %c0_124 = arith.constant 0 : index
    %119 = vector.load %arg1[%c3_123, %118, %c0_124] : memref<10x16x128xf32, #tpu.memory_space<vmem>>, vector<1x16x128xf32>
    %120 = vector.shape_cast %119 : vector<1x16x128xf32> to vector<16x128xf32>
    %121 = vector.broadcast %3 : f32 to vector<16x128xf32>
    %122 = arith.mulf %121, %120 : vector<16x128xf32>
    %123 = arith.addf %105, %122 : vector<16x128xf32>
    %124 = vector.broadcast %13 : f32 to vector<16x128xf32>
    %125 = arith.mulf %124, %120 : vector<16x128xf32>
    %126 = arith.addf %108, %125 : vector<16x128xf32>
    %127 = vector.broadcast %23 : f32 to vector<16x128xf32>
    %128 = arith.mulf %127, %120 : vector<16x128xf32>
    %129 = arith.addf %111, %128 : vector<16x128xf32>
    %130 = vector.broadcast %33 : f32 to vector<16x128xf32>
    %131 = arith.mulf %130, %120 : vector<16x128xf32>
    %132 = arith.addf %114, %131 : vector<16x128xf32>
    %133 = vector.broadcast %43 : f32 to vector<16x128xf32>
    %134 = arith.mulf %133, %120 : vector<16x128xf32>
    %135 = arith.addf %117, %134 : vector<16x128xf32>
    %c4_125 = arith.constant 4 : index
    %136 = arith.index_cast %68 : i32 to index
    %c0_126 = arith.constant 0 : index
    %137 = vector.load %arg1[%c4_125, %136, %c0_126] : memref<10x16x128xf32, #tpu.memory_space<vmem>>, vector<1x16x128xf32>
    %138 = vector.shape_cast %137 : vector<1x16x128xf32> to vector<16x128xf32>
    %139 = vector.broadcast %4 : f32 to vector<16x128xf32>
    %140 = arith.mulf %139, %138 : vector<16x128xf32>
    %141 = arith.addf %123, %140 : vector<16x128xf32>
    %142 = vector.broadcast %14 : f32 to vector<16x128xf32>
    %143 = arith.mulf %142, %138 : vector<16x128xf32>
    %144 = arith.addf %126, %143 : vector<16x128xf32>
    %145 = vector.broadcast %24 : f32 to vector<16x128xf32>
    %146 = arith.mulf %145, %138 : vector<16x128xf32>
    %147 = arith.addf %129, %146 : vector<16x128xf32>
    %148 = vector.broadcast %34 : f32 to vector<16x128xf32>
    %149 = arith.mulf %148, %138 : vector<16x128xf32>
    %150 = arith.addf %132, %149 : vector<16x128xf32>
    %151 = vector.broadcast %44 : f32 to vector<16x128xf32>
    %152 = arith.mulf %151, %138 : vector<16x128xf32>
    %153 = arith.addf %135, %152 : vector<16x128xf32>
    %c5_127 = arith.constant 5 : index
    %154 = arith.index_cast %68 : i32 to index
    %c0_128 = arith.constant 0 : index
    %155 = vector.load %arg1[%c5_127, %154, %c0_128] : memref<10x16x128xf32, #tpu.memory_space<vmem>>, vector<1x16x128xf32>
    %156 = vector.shape_cast %155 : vector<1x16x128xf32> to vector<16x128xf32>
    %157 = vector.broadcast %5 : f32 to vector<16x128xf32>
    %158 = arith.mulf %157, %156 : vector<16x128xf32>
    %159 = arith.addf %141, %158 : vector<16x128xf32>
    %160 = vector.broadcast %15 : f32 to vector<16x128xf32>
    %161 = arith.mulf %160, %156 : vector<16x128xf32>
    %162 = arith.addf %144, %161 : vector<16x128xf32>
    %163 = vector.broadcast %25 : f32 to vector<16x128xf32>
    %164 = arith.mulf %163, %156 : vector<16x128xf32>
    %165 = arith.addf %147, %164 : vector<16x128xf32>
    %166 = vector.broadcast %35 : f32 to vector<16x128xf32>
    %167 = arith.mulf %166, %156 : vector<16x128xf32>
    %168 = arith.addf %150, %167 : vector<16x128xf32>
    %169 = vector.broadcast %45 : f32 to vector<16x128xf32>
    %170 = arith.mulf %169, %156 : vector<16x128xf32>
    %171 = arith.addf %153, %170 : vector<16x128xf32>
    %c6_129 = arith.constant 6 : index
    %172 = arith.index_cast %68 : i32 to index
    %c0_130 = arith.constant 0 : index
    %173 = vector.load %arg1[%c6_129, %172, %c0_130] : memref<10x16x128xf32, #tpu.memory_space<vmem>>, vector<1x16x128xf32>
    %174 = vector.shape_cast %173 : vector<1x16x128xf32> to vector<16x128xf32>
    %175 = vector.broadcast %6 : f32 to vector<16x128xf32>
    %176 = arith.mulf %175, %174 : vector<16x128xf32>
    %177 = arith.addf %159, %176 : vector<16x128xf32>
    %178 = vector.broadcast %16 : f32 to vector<16x128xf32>
    %179 = arith.mulf %178, %174 : vector<16x128xf32>
    %180 = arith.addf %162, %179 : vector<16x128xf32>
    %181 = vector.broadcast %26 : f32 to vector<16x128xf32>
    %182 = arith.mulf %181, %174 : vector<16x128xf32>
    %183 = arith.addf %165, %182 : vector<16x128xf32>
    %184 = vector.broadcast %36 : f32 to vector<16x128xf32>
    %185 = arith.mulf %184, %174 : vector<16x128xf32>
    %186 = arith.addf %168, %185 : vector<16x128xf32>
    %187 = vector.broadcast %46 : f32 to vector<16x128xf32>
    %188 = arith.mulf %187, %174 : vector<16x128xf32>
    %189 = arith.addf %171, %188 : vector<16x128xf32>
    %c7_131 = arith.constant 7 : index
    %190 = arith.index_cast %68 : i32 to index
    %c0_132 = arith.constant 0 : index
    %191 = vector.load %arg1[%c7_131, %190, %c0_132] : memref<10x16x128xf32, #tpu.memory_space<vmem>>, vector<1x16x128xf32>
    %192 = vector.shape_cast %191 : vector<1x16x128xf32> to vector<16x128xf32>
    %193 = vector.broadcast %7 : f32 to vector<16x128xf32>
    %194 = arith.mulf %193, %192 : vector<16x128xf32>
    %195 = arith.addf %177, %194 : vector<16x128xf32>
    %196 = vector.broadcast %17 : f32 to vector<16x128xf32>
    %197 = arith.mulf %196, %192 : vector<16x128xf32>
    %198 = arith.addf %180, %197 : vector<16x128xf32>
    %199 = vector.broadcast %27 : f32 to vector<16x128xf32>
    %200 = arith.mulf %199, %192 : vector<16x128xf32>
    %201 = arith.addf %183, %200 : vector<16x128xf32>
    %202 = vector.broadcast %37 : f32 to vector<16x128xf32>
    %203 = arith.mulf %202, %192 : vector<16x128xf32>
    %204 = arith.addf %186, %203 : vector<16x128xf32>
    %205 = vector.broadcast %47 : f32 to vector<16x128xf32>
    %206 = arith.mulf %205, %192 : vector<16x128xf32>
    %207 = arith.addf %189, %206 : vector<16x128xf32>
    %c8_133 = arith.constant 8 : index
    %208 = arith.index_cast %68 : i32 to index
    %c0_134 = arith.constant 0 : index
    %209 = vector.load %arg1[%c8_133, %208, %c0_134] : memref<10x16x128xf32, #tpu.memory_space<vmem>>, vector<1x16x128xf32>
    %210 = vector.shape_cast %209 : vector<1x16x128xf32> to vector<16x128xf32>
    %211 = vector.broadcast %8 : f32 to vector<16x128xf32>
    %212 = arith.mulf %211, %210 : vector<16x128xf32>
    %213 = arith.addf %195, %212 : vector<16x128xf32>
    %214 = vector.broadcast %18 : f32 to vector<16x128xf32>
    %215 = arith.mulf %214, %210 : vector<16x128xf32>
    %216 = arith.addf %198, %215 : vector<16x128xf32>
    %217 = vector.broadcast %28 : f32 to vector<16x128xf32>
    %218 = arith.mulf %217, %210 : vector<16x128xf32>
    %219 = arith.addf %201, %218 : vector<16x128xf32>
    %220 = vector.broadcast %38 : f32 to vector<16x128xf32>
    %221 = arith.mulf %220, %210 : vector<16x128xf32>
    %222 = arith.addf %204, %221 : vector<16x128xf32>
    %223 = vector.broadcast %48 : f32 to vector<16x128xf32>
    %224 = arith.mulf %223, %210 : vector<16x128xf32>
    %225 = arith.addf %207, %224 : vector<16x128xf32>
    %c9_135 = arith.constant 9 : index
    %226 = arith.index_cast %68 : i32 to index
    %c0_136 = arith.constant 0 : index
    %227 = vector.load %arg1[%c9_135, %226, %c0_136] : memref<10x16x128xf32, #tpu.memory_space<vmem>>, vector<1x16x128xf32>
    %228 = vector.shape_cast %227 : vector<1x16x128xf32> to vector<16x128xf32>
    %229 = vector.broadcast %9 : f32 to vector<16x128xf32>
    %230 = arith.mulf %229, %228 : vector<16x128xf32>
    %231 = arith.addf %213, %230 : vector<16x128xf32>
    %232 = vector.broadcast %19 : f32 to vector<16x128xf32>
    %233 = arith.mulf %232, %228 : vector<16x128xf32>
    %234 = arith.addf %216, %233 : vector<16x128xf32>
    %235 = vector.broadcast %29 : f32 to vector<16x128xf32>
    %236 = arith.mulf %235, %228 : vector<16x128xf32>
    %237 = arith.addf %219, %236 : vector<16x128xf32>
    %238 = vector.broadcast %39 : f32 to vector<16x128xf32>
    %239 = arith.mulf %238, %228 : vector<16x128xf32>
    %240 = arith.addf %222, %239 : vector<16x128xf32>
    %241 = vector.broadcast %49 : f32 to vector<16x128xf32>
    %242 = arith.mulf %241, %228 : vector<16x128xf32>
    %243 = arith.addf %225, %242 : vector<16x128xf32>
    %244 = vector.broadcast %50 : f32 to vector<16x128xf32>
    %245 = arith.addf %231, %244 : vector<16x128xf32>
    %cst = arith.constant 0.000000e+00 : f32
    %246 = vector.broadcast %cst : f32 to vector<16x128xf32>
    %247 = arith.maximumf %245, %246 : vector<16x128xf32>
    %248 = vector.broadcast %51 : f32 to vector<16x128xf32>
    %249 = arith.addf %234, %248 : vector<16x128xf32>
    %cst_137 = arith.constant 0.000000e+00 : f32
    %250 = vector.broadcast %cst_137 : f32 to vector<16x128xf32>
    %251 = arith.maximumf %249, %250 : vector<16x128xf32>
    %252 = vector.broadcast %52 : f32 to vector<16x128xf32>
    %253 = arith.addf %237, %252 : vector<16x128xf32>
    %cst_138 = arith.constant 0.000000e+00 : f32
    %254 = vector.broadcast %cst_138 : f32 to vector<16x128xf32>
    %255 = arith.maximumf %253, %254 : vector<16x128xf32>
    %256 = vector.broadcast %53 : f32 to vector<16x128xf32>
    %257 = arith.addf %240, %256 : vector<16x128xf32>
    %cst_139 = arith.constant 0.000000e+00 : f32
    %258 = vector.broadcast %cst_139 : f32 to vector<16x128xf32>
    %259 = arith.maximumf %257, %258 : vector<16x128xf32>
    %260 = vector.broadcast %54 : f32 to vector<16x128xf32>
    %261 = arith.addf %243, %260 : vector<16x128xf32>
    %cst_140 = arith.constant 0.000000e+00 : f32
    %262 = vector.broadcast %cst_140 : f32 to vector<16x128xf32>
    %263 = arith.maximumf %261, %262 : vector<16x128xf32>
    %264 = vector.broadcast %55 : f32 to vector<16x128xf32>
    %265 = arith.mulf %264, %247 : vector<16x128xf32>
    %266 = vector.broadcast %56 : f32 to vector<16x128xf32>
    %267 = arith.mulf %266, %251 : vector<16x128xf32>
    %268 = arith.addf %265, %267 : vector<16x128xf32>
    %269 = vector.broadcast %57 : f32 to vector<16x128xf32>
    %270 = arith.mulf %269, %255 : vector<16x128xf32>
    %271 = arith.addf %268, %270 : vector<16x128xf32>
    %272 = vector.broadcast %58 : f32 to vector<16x128xf32>
    %273 = arith.mulf %272, %259 : vector<16x128xf32>
    %274 = arith.addf %271, %273 : vector<16x128xf32>
    %275 = vector.broadcast %59 : f32 to vector<16x128xf32>
    %276 = arith.mulf %275, %263 : vector<16x128xf32>
    %277 = arith.addf %274, %276 : vector<16x128xf32>
    %278 = vector.broadcast %65 : f32 to vector<16x128xf32>
    %279 = arith.addf %277, %278 : vector<16x128xf32>
    %c0_141 = arith.constant 0 : index
    %280 = arith.index_cast %68 : i32 to index
    %c0_142 = arith.constant 0 : index
    %281 = vector.load %arg6[%c0_141, %280, %c0_142] : memref<2x16x128xf32, #tpu.memory_space<vmem>>, vector<1x16x128xf32>
    %282 = vector.shape_cast %281 : vector<1x16x128xf32> to vector<16x128xf32>
    %283 = vector.shape_cast %279 : vector<16x128xf32> to vector<1x16x128xf32>
    tpu.vector_store %arg6[%c0_141, %280, %c0_142], %283 {strides = array<i32>} : memref<2x16x128xf32, #tpu.memory_space<vmem>>, vector<1x16x128xf32>,
    %284 = vector.broadcast %60 : f32 to vector<16x128xf32>
    %285 = arith.mulf %284, %247 : vector<16x128xf32>
    %286 = vector.broadcast %61 : f32 to vector<16x128xf32>
    %287 = arith.mulf %286, %251 : vector<16x128xf32>
    %288 = arith.addf %285, %287 : vector<16x128xf32>
    %289 = vector.broadcast %62 : f32 to vector<16x128xf32>
    %290 = arith.mulf %289, %255 : vector<16x128xf32>
    %291 = arith.addf %288, %290 : vector<16x128xf32>
    %292 = vector.broadcast %63 : f32 to vector<16x128xf32>
    %293 = arith.mulf %292, %259 : vector<16x128xf32>
    %294 = arith.addf %291, %293 : vector<16x128xf32>
    %295 = vector.broadcast %64 : f32 to vector<16x128xf32>
    %296 = arith.mulf %295, %263 : vector<16x128xf32>
    %297 = arith.addf %294, %296 : vector<16x128xf32>
    %298 = vector.broadcast %66 : f32 to vector<16x128xf32>
    %299 = arith.addf %297, %298 : vector<16x128xf32>
    %c1_143 = arith.constant 1 : index
    %300 = arith.index_cast %68 : i32 to index
    %c0_144 = arith.constant 0 : index
    %301 = vector.load %arg6[%c1_143, %300, %c0_144] : memref<2x16x128xf32, #tpu.memory_space<vmem>>, vector<1x16x128xf32>
    %302 = vector.shape_cast %301 : vector<1x16x128xf32> to vector<16x128xf32>
    %303 = vector.shape_cast %299 : vector<16x128xf32> to vector<1x16x128xf32>
    tpu.vector_store %arg6[%c1_143, %300, %c0_144], %303 {strides = array<i32>} : memref<2x16x128xf32, #tpu.memory_space<vmem>>, vector<1x16x128xf32>,
    %c1_i32 = arith.constant 1 : i32
    return
  }
  func.func @transform_0(%arg0: i32) -> (i32, i32, i32) {
    %c0_i32 = arith.constant 0 : i32
    %c0_i32_0 = arith.constant 0 : i32
    %c0_i32_1 = arith.constant 0 : i32
    return %c0_i32, %arg0, %c0_i32_0 : i32, i32, i32
  }
  func.func @transform_1(%arg0: i32) -> (i32, i32) {
    %c0_i32 = arith.constant 0 : i32
    %c0_i32_0 = arith.constant 0 : i32
    %c0_i32_1 = arith.constant 0 : i32
    return %c0_i32, %c0_i32_0 : i32, i32
  }
  func.func @transform_2(%arg0: i32) -> i32 {
    %c0_i32 = arith.constant 0 : i32
    %c0_i32_0 = arith.constant 0 : i32
    return %c0_i32 : i32
  }
  func.func @transform_3(%arg0: i32) -> (i32, i32) {
    %c0_i32 = arith.constant 0 : i32
    %c0_i32_0 = arith.constant 0 : i32
    %c0_i32_1 = arith.constant 0 : i32
    return %c0_i32, %c0_i32_0 : i32, i32
  }
  func.func @transform_4(%arg0: i32) -> i32 {
    %c0_i32 = arith.constant 0 : i32
    %c0_i32_0 = arith.constant 0 : i32
    return %c0_i32 : i32
  }
  func.func @transform_5(%arg0: i32) -> (i32, i32, i32) {
    %c0_i32 = arith.constant 0 : i32
    %c0_i32_0 = arith.constant 0 : i32
    %c0_i32_1 = arith.constant 0 : i32
    return %c0_i32, %arg0, %c0_i32_0 : i32, i32, i32
  }
}

</mosaic_0001>

<llo_original>
// kernel: _lambda_.1
$region0: #{_lambda_.1}
  #allocation0 [shape = 'u32[]', space=smem, size = 0x4, offset = 0x4, fixed_abs, tag = 'smem constant byte address 0x4 - core index']
  #allocation1 [shape = 'u32[144,128]{1,0:T(1,128)}', space=vmem, size = 0x12000, scoped, tag = 'internal scratch']
  %s0 = inlined_call_operand.vmem [shape: f32[10,20,128], index: 0, kind: input, shape index: {}]
  %s1 = inlined_call_operand.vmem [shape: f32[5,10], index: 1, kind: input, shape index: {}]
  %s2 = inlined_call_operand.vmem [shape: f32[5], index: 2, kind: input, shape index: {}]
  %s3 = inlined_call_operand.vmem [shape: f32[2,5], index: 3, kind: input, shape index: {}]
  %s4 = inlined_call_operand.vmem [shape: f32[2], index: 4, kind: input, shape index: {}]
  %s5 = inlined_call_operand.vmem [shape: f32[2,20,128], index: 5, kind: output, shape index: {}]
  %s6 = sld [smem:[#allocation0]]
  $region169: #{_lambda_.1} parent=0
    _
  %s8 = ssub.s32 1, %s6
  %s9 = scalar_select 0, %s8, %s6
  $region1: #{_lambda_.1} parent=0
    #allocation2 [shape = 'u8[163840]{0}', space=vmem, size = 0x28000, scoped, tag = 'input window, operand 0']
    #allocation3 [shape = 'u8[4096]{0}', space=smem, size = 0x1000, scoped, tag = 'input window, operand 1, single buffered']
    #allocation4 [shape = 's32[2]{0}', space=sflag, size = 0x8, scoped, tag = 'scoped memory for _lambda_.1']
    #allocation5 [shape = 'u8[512]{0}', space=smem, size = 0x200, scoped, tag = 'input window, operand 2, single buffered']
    #allocation6 [shape = 's32[1]{0}', space=sflag, size = 0x4, scoped, tag = 'scoped memory for _lambda_.1']
    #allocation7 [shape = 'u8[1024]{0}', space=smem, size = 0x400, scoped, tag = 'input window, operand 3, single buffered']
    #allocation8 [shape = 'u8[512]{0}', space=smem, size = 0x200, scoped, tag = 'input window, operand 4, single buffered']
    #allocation9 [shape = 's32[1]{0}', space=sflag, size = 0x4, scoped, tag = 'scoped memory for _lambda_.1']
    #allocation10 [shape = 'u8[32768]{0}', space=vmem, size = 0x8000, scoped, tag = 'output window, operand 0']
    %10 = vsyncpa [#allocation4], 0
    %11 = vsyncpa [#allocation6], 0
    %12 = vsyncpa [#allocation9], 0
    loop: start=0, step=1, limit=4
    $region2: #{_lambda_.1} parent=1 // loop_pre_header
      _
    $region3: #{_lambda_.1} parent=1 // loop_header
      %s14 = sphi 0, %s18
      %p15 = scmp.ge.s32.totalorder %s14, 4
      %s24 = sphi 0, %s26
      %s27 = sphi 0, %s24
      %s28 = sphi 0, %s27
      %s44 = sphi 0, %s28
      %s48 = sphi 0, %s48
      %s50 = sphi 0, %s48
      %s51 = sphi 0, %s50
      %s65 = sphi 0, %s51
      %s69 = sphi 0, %s69
      %s71 = sphi 0, %s69
      %s72 = sphi 0, %s71
      %s86 = sphi 0, %s72
      %s90 = sphi 0, %s90
      %s92 = sphi 0, %s90
      %s93 = sphi 0, %s92
      %s107 = sphi 0, %s93
      %s111 = sphi 0, %s111
      %s113 = sphi 0, %s111
      %s114 = sphi 0, %s113
      %s128 = sphi 0, %s114
      %s134 = sphi 0, %s136
      %s137 = sphi 0, %s134
      %s138 = sphi 0, %s137
      %s154 = sphi 0, %s138
    $region4: #{_lambda_.1} parent=1 // loop_header_branch
      %17 = sbr.rel (%p15) target = $region8
    $region5: #{_lambda_.1} parent=1 // loop_body
      %s19 = ssub.s32 %s14, 1
      %s20 = ssub.s32 %s14, 2
      %s21 = sadd.s32 %s14, 1
      %s22 = ssub.s32 %s14, %s21
      %p23 = scmp.eq.s32.totalorder %s22, 0
      %s25 = sadd.s32 %s24, 1
      %s26 = scalar_select %p23, %s24, %s25
      %p29 = pneg %p23
      %p30 = scmp.eq.s32.totalorder %s14, 1
      %p31 = por %p29, %p30
      %p32 = scmp.ne.s32.totalorder %s24, %s27
      %p33 = scmp.eq.s32.totalorder %s14, 0
      %p34 = por %p32, %p33
      %p35 = scmp.ne.s32.totalorder %s24, %s27
      %p36 = scmp.eq.s32.totalorder %s19, 1
      %p37 = por %p35, %p36
      %p38 = scmp.ne.s32.totalorder %s27, %s28
      %p39 = scmp.eq.s32.totalorder %s19, 0
      %p40 = por %p38, %p39
      %p41 = scmp.ne.s32.totalorder %s27, %s28
      %p42 = scmp.eq.s32.totalorder %s20, 1
      %p43 = por %p41, %p42
      %p45 = scmp.ne.s32.totalorder %s28, %s44
      %p46 = scmp.eq.s32.totalorder %s20, 0
      %p47 = por %p45, %p46
      %s49 = sadd.s32 %s48, 1
      %p52 = scmp.eq.s32.totalorder %s14, 1
      %p53 = scmp.ne.s32.totalorder %s48, %s50
      %p54 = scmp.eq.s32.totalorder %s14, 0
      %p55 = por %p53, %p54
      %p56 = scmp.ne.s32.totalorder %s48, %s50
      %p57 = scmp.eq.s32.totalorder %s19, 1
      %p58 = por %p56, %p57
      %p59 = scmp.ne.s32.totalorder %s50, %s51
      %p60 = scmp.eq.s32.totalorder %s19, 0
      %p61 = por %p59, %p60
      %p62 = scmp.ne.s32.totalorder %s50, %s51
      %p63 = scmp.eq.s32.totalorder %s20, 1
      %p64 = por %p62, %p63
      %p66 = scmp.ne.s32.totalorder %s51, %s65
      %p67 = scmp.eq.s32.totalorder %s20, 0
      %p68 = por %p66, %p67
      %s70 = sadd.s32 %s69, 1
      %p73 = scmp.eq.s32.totalorder %s14, 1
      %p74 = scmp.ne.s32.totalorder %s69, %s71
      %p75 = scmp.eq.s32.totalorder %s14, 0
      %p76 = por %p74, %p75
      %p77 = scmp.ne.s32.totalorder %s69, %s71
      %p78 = scmp.eq.s32.totalorder %s19, 1
      %p79 = por %p77, %p78
      %p80 = scmp.ne.s32.totalorder %s71, %s72
      %p81 = scmp.eq.s32.totalorder %s19, 0
      %p82 = por %p80, %p81
      %p83 = scmp.ne.s32.totalorder %s71, %s72
      %p84 = scmp.eq.s32.totalorder %s20, 1
      %p85 = por %p83, %p84
      %p87 = scmp.ne.s32.totalorder %s72, %s86
      %p88 = scmp.eq.s32.totalorder %s20, 0
      %p89 = por %p87, %p88
      %s91 = sadd.s32 %s90, 1
      %p94 = scmp.eq.s32.totalorder %s14, 1
      %p95 = scmp.ne.s32.totalorder %s90, %s92
      %p96 = scmp.eq.s32.totalorder %s14, 0
      %p97 = por %p95, %p96
      %p98 = scmp.ne.s32.totalorder %s90, %s92
      %p99 = scmp.eq.s32.totalorder %s19, 1
      %p100 = por %p98, %p99
      %p101 = scmp.ne.s32.totalorder %s92, %s93
      %p102 = scmp.eq.s32.totalorder %s19, 0
      %p103 = por %p101, %p102
      %p104 = scmp.ne.s32.totalorder %s92, %s93
      %p105 = scmp.eq.s32.totalorder %s20, 1
      %p106 = por %p104, %p105
      %p108 = scmp.ne.s32.totalorder %s93, %s107
      %p109 = scmp.eq.s32.totalorder %s20, 0
      %p110 = por %p108, %p109
      %s112 = sadd.s32 %s111, 1
      %p115 = scmp.eq.s32.totalorder %s14, 1
      %p116 = scmp.ne.s32.totalorder %s111, %s113
      %p117 = scmp.eq.s32.totalorder %s14, 0
      %p118 = por %p116, %p117
      %p119 = scmp.ne.s32.totalorder %s111, %s113
      %p120 = scmp.eq.s32.totalorder %s19, 1
      %p121 = por %p119, %p120
      %p122 = scmp.ne.s32.totalorder %s113, %s114
      %p123 = scmp.eq.s32.totalorder %s19, 0
      %p124 = por %p122, %p123
      %p125 = scmp.ne.s32.totalorder %s113, %s114
      %p126 = scmp.eq.s32.totalorder %s20, 1
      %p127 = por %p125, %p126
      %p129 = scmp.ne.s32.totalorder %s114, %s128
      %p130 = scmp.eq.s32.totalorder %s20, 0
      %p131 = por %p129, %p130
      %s132 = ssub.s32 %s14, %s21
      %p133 = scmp.eq.s32.totalorder %s132, 0
      %s135 = sadd.s32 %s134, 1
      %s136 = scalar_select %p133, %s134, %s135
      %p139 = pneg %p133
      %p140 = scmp.eq.s32.totalorder %s14, 1
      %p141 = por %p139, %p140
      %p142 = scmp.ne.s32.totalorder %s134, %s137
      %p143 = scmp.eq.s32.totalorder %s14, 0
      %p144 = por %p142, %p143
      %p145 = scmp.ne.s32.totalorder %s134, %s137
      %p146 = scmp.eq.s32.totalorder %s19, 1
      %p147 = por %p145, %p146
      %p148 = scmp.ne.s32.totalorder %s137, %s138
      %p149 = scmp.eq.s32.totalorder %s19, 0
      %p150 = por %p148, %p149
      %p151 = scmp.ne.s32.totalorder %s137, %s138
      %p152 = scmp.eq.s32.totalorder %s20, 1
      %p153 = por %p151, %p152
      %p155 = scmp.ne.s32.totalorder %s138, %s154
      %p156 = scmp.eq.s32.totalorder %s20, 0
      %p157 = por %p155, %p156
      %p158 = scmp.le.s32.totalorder 1, %s14
      %p159 = scmp.lt.s32.totalorder %s14, 3
      %p160 = pnand %p158, %p159
      %p161 = pneg %p160
      // Predicated region
      $region9: #{_lambda_.1} parent=5 // pred_check
        _
      $region10: #{_lambda_.1} parent=5 // pred_check_branch
        %163 = sbr.rel (%p160) target = $region12
      $region11: #{_lambda_.1} parent=5 // pred_region
        %s164 = ssub.s32 %s14, 1
        // Predicated region
        $region13: #{_lambda_.1} parent=11 // pred_check
          %p165 = pneg %p61
        $region14: #{_lambda_.1} parent=11 // pred_check_branch
          %167 = sbr.rel (%p165) target = $region16
        $region15: #{_lambda_.1} parent=11 // pred_region
          %s169 = ssub.s32 128, 128
          %170 = vsyncadd [#allocation4], %s169
          %s172 = sshll.u32 %s1, 4
          %s173 = int_to_ptr.vmem [resolvable:$true] %s172
          %175 = dma.vmem_to_smem %s173, 128, [#allocation3], [#allocation4]
        $region16: #{_lambda_.1} parent=11 // pred_fallthru
          _
        // Predicated region
        $region17: #{_lambda_.1} parent=11 // pred_check
          %p176 = pneg %p82
        $region18: #{_lambda_.1} parent=11 // pred_check_branch
          %178 = sbr.rel (%p176) target = $region20
        $region19: #{_lambda_.1} parent=11 // pred_region
          %s180 = ssub.s32 16, 16
          %181 = vsyncadd [#allocation6], %s180
          %s183 = sshll.u32 %s2, 4
          %s184 = int_to_ptr.vmem [resolvable:$true] %s183
          %186 = dma.vmem_to_smem %s184, 16, [#allocation5], [#allocation6]
        $region20: #{_lambda_.1} parent=11 // pred_fallthru
          _
        // Predicated region
        $region21: #{_lambda_.1} parent=11 // pred_check
          %p187 = pneg %p103
        $region22: #{_lambda_.1} parent=11 // pred_check_branch
          %189 = sbr.rel (%p187) target = $region24
        $region23: #{_lambda_.1} parent=11 // pred_region
          %s191 = ssub.s32 32, 32
          %192 = vsyncadd [#allocation6], %s191
          %s194 = sshll.u32 %s3, 4
          %s195 = int_to_ptr.vmem [resolvable:$true] %s194
          %197 = dma.vmem_to_smem %s195, 32, [#allocation7], [#allocation6]
        $region24: #{_lambda_.1} parent=11 // pred_fallthru
          _
        // Predicated region
        $region25: #{_lambda_.1} parent=11 // pred_check
          %p198 = pneg %p124
        $region26: #{_lambda_.1} parent=11 // pred_check_branch
          %200 = sbr.rel (%p198) target = $region28
        $region27: #{_lambda_.1} parent=11 // pred_region
          %s202 = ssub.s32 16, 16
          %203 = vsyncadd [#allocation9], %s202
          %s205 = sshll.u32 %s4, 4
          %s206 = int_to_ptr.vmem [resolvable:$true] %s205
          %208 = dma.vmem_to_smem %s206, 16, [#allocation8], [#allocation9]
        $region28: #{_lambda_.1} parent=11 // pred_fallthru
          _
      $region12: #{_lambda_.1} parent=5 // pred_fallthru
        _
      %p209 = scmp.lt.s32.totalorder %s14, 2
      // Predicated region
      $region29: #{_lambda_.1} parent=5 // pred_check
        %p210 = pneg %p209
      $region30: #{_lambda_.1} parent=5 // pred_check_branch
        %212 = sbr.rel (%p210) target = $region32
      $region31: #{_lambda_.1} parent=5 // pred_region
        // Predicated region
        $region33: #{_lambda_.1} parent=31 // pred_check
          %p213 = pneg %p34
        $region34: #{_lambda_.1} parent=31 // pred_check_branch
          %215 = sbr.rel (%p213) target = $region36
        $region35: #{_lambda_.1} parent=31 // pred_region
          %s216 = sand.u32 %s24, 1
          %s217 = sand.u32 %s24, 1
          %s218 = smul.addr %s217, 160
          %s219 = scalar_lea.vmem [#allocation2], %s218
          %s220 = smul.u32 2, %s14
          %s221 = ssub.s32 3, %s220
          %p222 = scmp.lt.s32.totalorder %s221, 2
          %s223 = scalar_select %p222, %s221, 2
          %s224 = smul.u32 1280, %s223
          %p225 = scmp.ne.s32.totalorder 0, %s224
          %s226 = smul.addr %s220, 8
          %s227 = scalar_lea.vmem %s0, %s226
          // Predicated region
          $region37: #{_lambda_.1} parent=35 // pred_check
            %p228 = pneg %p225
          $region38: #{_lambda_.1} parent=35 // pred_check_branch
            %230 = sbr.rel (%p228) target = $region40
          $region39: #{_lambda_.1} parent=35 // pred_region
            // Predicated region
            $region41: #{_lambda_.1} parent=39 // pred_check
              _
            $region42: #{_lambda_.1} parent=39 // pred_check_branch
              %232 = sbr.rel (0) target = $region44
            $region43: #{_lambda_.1} parent=39 // pred_region
              // Predicated region
              $region63: #{_lambda_.1} parent=43 // pred_check
                _
              $region64: #{_lambda_.1} parent=43 // pred_check_branch
                %338 = sbr.rel (0) target = $region66
              $region65: #{_lambda_.1} parent=43 // pred_region
                %s339 = sshrl.u32 %s223, 1
                // While loop
                $region67: #{_lambda_.1} parent=65 // loop_pre_header
                  _
                $region68: #{_lambda_.1} parent=65 // loop_header
                  %s341 = sphi 0, %s343
                  %p342 = scmp.ge.s32.totalorder %s341, %s339
                  %s346 = sphi 0, %s391
                  %s347 = sphi %s227, %s394
                  %s348 = sphi %s219, %s395
                $region69: #{_lambda_.1} parent=65 // loop_header_branch
                  %345 = sbr.rel (%p342) target = $region73
                $region70: #{_lambda_.1} parent=65 // loop_body
                  %v349 = vld [vmem:[%s347] sm:$0xff]
                  %350 = vst [vmem:[%s348] sm:$0xff] %v349
                  %v351 = vld [vmem:[%s347 + $0x8] sm:$0xff]
                  %352 = vst [vmem:[%s348 + $0x8] sm:$0xff] %v351
                  %v353 = vld [vmem:[%s347 + $0x18] sm:$0xff]
                  %354 = vst [vmem:[%s348 + $0x10] sm:$0xff] %v353
                  %v355 = vld [vmem:[%s347 + $0x20] sm:$0xff]
                  %356 = vst [vmem:[%s348 + $0x18] sm:$0xff] %v355
                  %v357 = vld [vmem:[%s347 + $0x30] sm:$0xff]
                  %358 = vst [vmem:[%s348 + $0x20] sm:$0xff] %v357
                  %v359 = vld [vmem:[%s347 + $0x38] sm:$0xff]
                  %360 = vst [vmem:[%s348 + $0x28] sm:$0xff] %v359
                  %v361 = vld [vmem:[%s347 + $0x48] sm:$0xff]
                  %362 = vst [vmem:[%s348 + $0x30] sm:$0xff] %v361
                  %v363 = vld [vmem:[%s347 + $0x50] sm:$0xff]
                  %364 = vst [vmem:[%s348 + $0x38] sm:$0xff] %v363
                  %v365 = vld [vmem:[%s347 + $0x60] sm:$0xff]
                  %366 = vst [vmem:[%s348 + $0x40] sm:$0xff] %v365
                  %v367 = vld [vmem:[%s347 + $0x68] sm:$0xff]
                  %368 = vst [vmem:[%s348 + $0x48] sm:$0xff] %v367
                  %v369 = vld [vmem:[%s347 + $0x78] sm:$0xff]
                  %370 = vst [vmem:[%s348 + $0x50] sm:$0xff] %v369
                  %v371 = vld [vmem:[%s347 + $0x80] sm:$0xff]
                  %372 = vst [vmem:[%s348 + $0x58] sm:$0xff] %v371
                  %v373 = vld [vmem:[%s347 + $0x90] sm:$0xff]
                  %374 = vst [vmem:[%s348 + $0x60] sm:$0xff] %v373
                  %v375 = vld [vmem:[%s347 + $0x98] sm:$0xff]
                  %376 = vst [vmem:[%s348 + $0x68] sm:$0xff] %v375
                  %v377 = vld [vmem:[%s347 + $0xa8] sm:$0xff]
                  %378 = vst [vmem:[%s348 + $0x70] sm:$0xff] %v377
                  %v379 = vld [vmem:[%s347 + $0xb0] sm:$0xff]
                  %380 = vst [vmem:[%s348 + $0x78] sm:$0xff] %v379
                  %v381 = vld [vmem:[%s347 + $0xc0] sm:$0xff]
                  %382 = vst [vmem:[%s348 + $0x80] sm:$0xff] %v381
                  %v383 = vld [vmem:[%s347 + $0xc8] sm:$0xff]
                  %384 = vst [vmem:[%s348 + $0x88] sm:$0xff] %v383
                  %v385 = vld [vmem:[%s347 + $0xd8] sm:$0xff]
                  %386 = vst [vmem:[%s348 + $0x90] sm:$0xff] %v385
                  %v387 = vld [vmem:[%s347 + $0xe0] sm:$0xff]
                  %388 = vst [vmem:[%s348 + $0x98] sm:$0xff] %v387
                  %s389 = sadd.s32 1, %s346
                  %p390 = scmp.ge.s32.totalorder %s389, %s339
                  %s391 = scalar_select %p390, 0, %s389
                  %s392 = smul.u32 %s391, 16
                  %s393 = smul.u32 %s391, 16
                  %s394 = scalar_lea.vmem %s227, %s392
                  %s395 = scalar_lea.vmem %s219, %s393 [#allocation2]
                $region71: #{_lambda_.1} parent=65 // loop_footer
                  %s343 = sadd.s32 %s341, 1
                $region72: #{_lambda_.1} parent=65 // loop_footer_branch
                  %340 = sbr.rel target = $region68
                $region73: #{_lambda_.1} parent=65 // loop_exit
                  _
                %s396 = sshrl.u32 %s223, 1
                %s397 = sand.u32 %s223, 1
                %s398 = smul.u32 %s396, 2
                %s399 = smul.u32 8, %s398
                %s400 = scalar_lea.vmem %s227, %s399
                %s401 = smul.u32 8, %s398
                %s402 = scalar_lea.vmem %s219, %s401 [#allocation2]
                // While loop
                $region74: #{_lambda_.1} parent=65 // loop_pre_header
                  _
                $region75: #{_lambda_.1} parent=65 // loop_header
                  %s404 = sphi 0, %s406
                  %p405 = scmp.ge.s32.totalorder %s404, %s397
                  %s409 = sphi 0, %s434
                  %s410 = sphi %s400, %s437
                  %s411 = sphi %s402, %s438
                $region76: #{_lambda_.1} parent=65 // loop_header_branch
                  %408 = sbr.rel (%p405) target = $region80
                $region77: #{_lambda_.1} parent=65 // loop_body
                  %v412 = vld [vmem:[%s410] sm:$0xff]
                  %413 = vst [vmem:[%s411] sm:$0xff] %v412
                  %v414 = vld [vmem:[%s410 + $0x18] sm:$0xff]
                  %415 = vst [vmem:[%s411 + $0x10] sm:$0xff] %v414
                  %v416 = vld [vmem:[%s410 + $0x30] sm:$0xff]
                  %417 = vst [vmem:[%s411 + $0x20] sm:$0xff] %v416
                  %v418 = vld [vmem:[%s410 + $0x48] sm:$0xff]
                  %419 = vst [vmem:[%s411 + $0x30] sm:$0xff] %v418
                  %v420 = vld [vmem:[%s410 + $0x60] sm:$0xff]
                  %421 = vst [vmem:[%s411 + $0x40] sm:$0xff] %v420
                  %v422 = vld [vmem:[%s410 + $0x78] sm:$0xff]
                  %423 = vst [vmem:[%s411 + $0x50] sm:$0xff] %v422
                  %v424 = vld [vmem:[%s410 + $0x90] sm:$0xff]
                  %425 = vst [vmem:[%s411 + $0x60] sm:$0xff] %v424
                  %v426 = vld [vmem:[%s410 + $0xa8] sm:$0xff]
                  %427 = vst [vmem:[%s411 + $0x70] sm:$0xff] %v426
                  %v428 = vld [vmem:[%s410 + $0xc0] sm:$0xff]
                  %429 = vst [vmem:[%s411 + $0x80] sm:$0xff] %v428
                  %v430 = vld [vmem:[%s410 + $0xd8] sm:$0xff]
                  %431 = vst [vmem:[%s411 + $0x90] sm:$0xff] %v430
                  %s432 = sadd.s32 1, %s409
                  %p433 = scmp.ge.s32.totalorder %s432, %s397
                  %s434 = scalar_select %p433, 0, %s432
                  %s435 = smul.u32 %s434, 8
                  %s436 = smul.u32 %s434, 8
                  %s437 = scalar_lea.vmem %s400, %s435
                  %s438 = scalar_lea.vmem %s402, %s436 [#allocation2]
                $region78: #{_lambda_.1} parent=65 // loop_footer
                  %s406 = sadd.s32 %s404, 1
                $region79: #{_lambda_.1} parent=65 // loop_footer_branch
                  %403 = sbr.rel target = $region75
                $region80: #{_lambda_.1} parent=65 // loop_exit
                  _
              $region66: #{_lambda_.1} parent=43 // pred_fallthru
                _
              // Predicated region
              $region81: #{_lambda_.1} parent=43 // pred_check
                _
              $region82: #{_lambda_.1} parent=43 // pred_check_branch
                %440 = sbr.rel target = $region84
              $region83: #{_lambda_.1} parent=43 // pred_region
                _
              $region84: #{_lambda_.1} parent=43 // pred_fallthru
                _
            $region44: #{_lambda_.1} parent=39 // pred_fallthru
              _
            // Predicated region
            $region45: #{_lambda_.1} parent=39 // pred_check
              _
            $region46: #{_lambda_.1} parent=39 // pred_check_branch
              %234 = sbr.rel target = $region48
            $region47: #{_lambda_.1} parent=39 // pred_region
              %s236 = ssub.s32 256, 1
              %s237 = sshrl.u32 %s223, 1
              // While loop
              $region49: #{_lambda_.1} parent=47 // loop_pre_header
                _
              $region50: #{_lambda_.1} parent=47 // loop_header
                %s239 = sphi 0, %s241
                %p240 = scmp.ge.s32.totalorder %s239, %s237
                %s244 = sphi 0, %s289
                %s245 = sphi %s227, %s292
                %s246 = sphi %s219, %s293
              $region51: #{_lambda_.1} parent=47 // loop_header_branch
                %243 = sbr.rel (%p240) target = $region55
              $region52: #{_lambda_.1} parent=47 // loop_body
                %v247 = vld [vmem:[%s245] sm:%s236]
                %248 = vst [vmem:[%s246] sm:%s236] %v247
                %v249 = vld [vmem:[%s245 + $0x8] sm:%s236]
                %250 = vst [vmem:[%s246 + $0x8] sm:%s236] %v249
                %v251 = vld [vmem:[%s245 + $0x18] sm:%s236]
                %252 = vst [vmem:[%s246 + $0x10] sm:%s236] %v251
                %v253 = vld [vmem:[%s245 + $0x20] sm:%s236]
                %254 = vst [vmem:[%s246 + $0x18] sm:%s236] %v253
                %v255 = vld [vmem:[%s245 + $0x30] sm:%s236]
                %256 = vst [vmem:[%s246 + $0x20] sm:%s236] %v255
                %v257 = vld [vmem:[%s245 + $0x38] sm:%s236]
                %258 = vst [vmem:[%s246 + $0x28] sm:%s236] %v257
                %v259 = vld [vmem:[%s245 + $0x48] sm:%s236]
                %260 = vst [vmem:[%s246 + $0x30] sm:%s236] %v259
                %v261 = vld [vmem:[%s245 + $0x50] sm:%s236]
                %262 = vst [vmem:[%s246 + $0x38] sm:%s236] %v261
                %v263 = vld [vmem:[%s245 + $0x60] sm:%s236]
                %264 = vst [vmem:[%s246 + $0x40] sm:%s236] %v263
                %v265 = vld [vmem:[%s245 + $0x68] sm:%s236]
                %266 = vst [vmem:[%s246 + $0x48] sm:%s236] %v265
                %v267 = vld [vmem:[%s245 + $0x78] sm:%s236]
                %268 = vst [vmem:[%s246 + $0x50] sm:%s236] %v267
                %v269 = vld [vmem:[%s245 + $0x80] sm:%s236]
                %270 = vst [vmem:[%s246 + $0x58] sm:%s236] %v269
                %v271 = vld [vmem:[%s245 + $0x90] sm:%s236]
                %272 = vst [vmem:[%s246 + $0x60] sm:%s236] %v271
                %v273 = vld [vmem:[%s245 + $0x98] sm:%s236]
                %274 = vst [vmem:[%s246 + $0x68] sm:%s236] %v273
                %v275 = vld [vmem:[%s245 + $0xa8] sm:%s236]
                %276 = vst [vmem:[%s246 + $0x70] sm:%s236] %v275
                %v277 = vld [vmem:[%s245 + $0xb0] sm:%s236]
                %278 = vst [vmem:[%s246 + $0x78] sm:%s236] %v277
                %v279 = vld [vmem:[%s245 + $0xc0] sm:%s236]
                %280 = vst [vmem:[%s246 + $0x80] sm:%s236] %v279
                %v281 = vld [vmem:[%s245 + $0xc8] sm:%s236]
                %282 = vst [vmem:[%s246 + $0x88] sm:%s236] %v281
                %v283 = vld [vmem:[%s245 + $0xd8] sm:%s236]
                %284 = vst [vmem:[%s246 + $0x90] sm:%s236] %v283
                %v285 = vld [vmem:[%s245 + $0xe0] sm:%s236]
                %286 = vst [vmem:[%s246 + $0x98] sm:%s236] %v285
                %s287 = sadd.s32 1, %s244
                %p288 = scmp.ge.s32.totalorder %s287, %s237
                %s289 = scalar_select %p288, 0, %s287
                %s290 = smul.u32 %s289, 16
                %s291 = smul.u32 %s289, 16
                %s292 = scalar_lea.vmem %s227, %s290
                %s293 = scalar_lea.vmem %s219, %s291 [#allocation2]
              $region53: #{_lambda_.1} parent=47 // loop_footer
                %s241 = sadd.s32 %s239, 1
              $region54: #{_lambda_.1} parent=47 // loop_footer_branch
                %238 = sbr.rel target = $region50
              $region55: #{_lambda_.1} parent=47 // loop_exit
                _
              %s294 = sshrl.u32 %s223, 1
              %s295 = sand.u32 %s223, 1
              %s296 = smul.u32 %s294, 2
              %s297 = smul.u32 8, %s296
              %s298 = scalar_lea.vmem %s227, %s297
              %s299 = smul.u32 8, %s296
              %s300 = scalar_lea.vmem %s219, %s299 [#allocation2]
              // While loop
              $region56: #{_lambda_.1} parent=47 // loop_pre_header
                _
              $region57: #{_lambda_.1} parent=47 // loop_header
                %s302 = sphi 0, %s304
                %p303 = scmp.ge.s32.totalorder %s302, %s295
                %s307 = sphi 0, %s332
                %s308 = sphi %s298, %s335
                %s309 = sphi %s300, %s336
              $region58: #{_lambda_.1} parent=47 // loop_header_branch
                %306 = sbr.rel (%p303) target = $region62
              $region59: #{_lambda_.1} parent=47 // loop_body
                %v310 = vld [vmem:[%s308] sm:%s236]
                %311 = vst [vmem:[%s309] sm:%s236] %v310
                %v312 = vld [vmem:[%s308 + $0x18] sm:%s236]
                %313 = vst [vmem:[%s309 + $0x10] sm:%s236] %v312
                %v314 = vld [vmem:[%s308 + $0x30] sm:%s236]
                %315 = vst [vmem:[%s309 + $0x20] sm:%s236] %v314
                %v316 = vld [vmem:[%s308 + $0x48] sm:%s236]
                %317 = vst [vmem:[%s309 + $0x30] sm:%s236] %v316
                %v318 = vld [vmem:[%s308 + $0x60] sm:%s236]
                %319 = vst [vmem:[%s309 + $0x40] sm:%s236] %v318
                %v320 = vld [vmem:[%s308 + $0x78] sm:%s236]
                %321 = vst [vmem:[%s309 + $0x50] sm:%s236] %v320
                %v322 = vld [vmem:[%s308 + $0x90] sm:%s236]
                %323 = vst [vmem:[%s309 + $0x60] sm:%s236] %v322
                %v324 = vld [vmem:[%s308 + $0xa8] sm:%s236]
                %325 = vst [vmem:[%s309 + $0x70] sm:%s236] %v324
                %v326 = vld [vmem:[%s308 + $0xc0] sm:%s236]
                %327 = vst [vmem:[%s309 + $0x80] sm:%s236] %v326
                %v328 = vld [vmem:[%s308 + $0xd8] sm:%s236]
                %329 = vst [vmem:[%s309 + $0x90] sm:%s236] %v328
                %s330 = sadd.s32 1, %s307
                %p331 = scmp.ge.s32.totalorder %s330, %s295
                %s332 = scalar_select %p331, 0, %s330
                %s333 = smul.u32 %s332, 8
                %s334 = smul.u32 %s332, 8
                %s335 = scalar_lea.vmem %s298, %s333
                %s336 = scalar_lea.vmem %s300, %s334 [#allocation2]
              $region60: #{_lambda_.1} parent=47 // loop_footer
                %s304 = sadd.s32 %s302, 1
              $region61: #{_lambda_.1} parent=47 // loop_footer_branch
                %301 = sbr.rel target = $region57
              $region62: #{_lambda_.1} parent=47 // loop_exit
                _
            $region48: #{_lambda_.1} parent=39 // pred_fallthru
              _
          $region40: #{_lambda_.1} parent=35 // pred_fallthru
            _
          %441 = vnop
        $region36: #{_lambda_.1} parent=31 // pred_fallthru
          _
      $region32: #{_lambda_.1} parent=5 // pred_fallthru
        _
      %p442 = scmp.le.s32.totalorder 1, %s14
      %p443 = scmp.lt.s32.totalorder %s14, 3
      %p444 = pnand %p442, %p443
      %p445 = pneg %p444
      // Predicated region
      $region85: #{_lambda_.1} parent=5 // pred_check
        _
      $region86: #{_lambda_.1} parent=5 // pred_check_branch
        %447 = sbr.rel (%p444) target = $region88
      $region87: #{_lambda_.1} parent=5 // pred_region
        %s448 = ssub.s32 %s14, 1
        %s449 = sand.u32 %s27, 1
        %s450 = sand.u32 %s27, 1
        %s451 = smul.addr %s450, 160
        %s452 = scalar_lea.vmem [#allocation2], %s451
        // Predicated region
        $region89: #{_lambda_.1} parent=87 // pred_check
          %p453 = pneg %p40
        $region90: #{_lambda_.1} parent=87 // pred_check_branch
          %455 = sbr.rel (%p453) target = $region92
        $region91: #{_lambda_.1} parent=87 // pred_region
          _
        $region92: #{_lambda_.1} parent=87 // pred_fallthru
          _
        // Predicated region
        $region93: #{_lambda_.1} parent=87 // pred_check
          %p456 = pneg %p61
        $region94: #{_lambda_.1} parent=87 // pred_check_branch
          %458 = sbr.rel (%p456) target = $region96
        $region95: #{_lambda_.1} parent=87 // pred_region
          %459 = dma.done [#allocation4], 128
        $region96: #{_lambda_.1} parent=87 // pred_fallthru
          _
        // Predicated region
        $region97: #{_lambda_.1} parent=87 // pred_check
          %p460 = pneg %p82
        $region98: #{_lambda_.1} parent=87 // pred_check_branch
          %462 = sbr.rel (%p460) target = $region100
        $region99: #{_lambda_.1} parent=87 // pred_region
          %463 = dma.done [#allocation6], 16
        $region100: #{_lambda_.1} parent=87 // pred_fallthru
          _
        // Predicated region
        $region101: #{_lambda_.1} parent=87 // pred_check
          %p464 = pneg %p103
        $region102: #{_lambda_.1} parent=87 // pred_check_branch
          %466 = sbr.rel (%p464) target = $region104
        $region103: #{_lambda_.1} parent=87 // pred_region
          %467 = dma.done [#allocation6], 32
        $region104: #{_lambda_.1} parent=87 // pred_fallthru
          _
        // Predicated region
        $region105: #{_lambda_.1} parent=87 // pred_check
          %p468 = pneg %p124
        $region106: #{_lambda_.1} parent=87 // pred_check_branch
          %470 = sbr.rel (%p468) target = $region108
        $region107: #{_lambda_.1} parent=87 // pred_region
          %471 = dma.done [#allocation9], 16
        $region108: #{_lambda_.1} parent=87 // pred_fallthru
          _
        %472 = sfence
        %s473 = sand.u32 %s27, 1
        %s474 = sand.u32 %s27, 1
        %s475 = smul.addr %s474, 160
        %s476 = scalar_lea.vmem [#allocation2], %s475
        %p477 = pneg %p40
        %p478 = pneg %p37
        %p479 = pneg %p61
        %p480 = pneg %p58
        %p481 = pneg %p82
        %p482 = pneg %p79
        %p483 = pneg %p103
        %p484 = pneg %p100
        %p485 = pneg %p124
        %p486 = pneg %p121
        %p487 = pneg %p150
        %p488 = pneg %p147
        %s489 = sand.u32 %s137, 1
        %s490 = sand.u32 %s137, 1
        %s491 = smul.addr %s490, 32
        %s492 = scalar_lea.vmem [#allocation10], %s491
        %s493 = smul.u32 2, %s19
        %s494 = ssub.s32 3, %s493
        %p495 = scmp.lt.s32.totalorder %s494, 2
        %s496 = scalar_select %p495, %s494, 2
        %s497 = smul.u32 1280, %s496
        %s498 = smul.u32 2, %s19
        %s499 = ssub.s32 3, %s498
        %p500 = scmp.lt.s32.totalorder %s499, 2
        %s501 = scalar_select %p500, %s499, 2
        %s502 = smul.u32 256, %s501
        %s503 = sld [smem:[#allocation3]]
        %s504 = sld [smem:[#allocation3 + $0x1]]
        %s505 = sld [smem:[#allocation3 + $0x2]]
        %s506 = sld [smem:[#allocation3 + $0x3]]
        %s507 = sld [smem:[#allocation3 + $0x4]]
        %s508 = sld [smem:[#allocation3 + $0x5]]
        %s509 = sld [smem:[#allocation3 + $0x6]]
        %s510 = sld [smem:[#allocation3 + $0x7]]
        %s511 = sld [smem:[#allocation3 + $0x8]]
        %s512 = sld [smem:[#allocation3 + $0x9]]
        %s513 = sld [smem:[#allocation3 + $0x80]]
        %s514 = sld [smem:[#allocation3 + $0x81]]
        %s515 = sld [smem:[#allocation3 + $0x82]]
        %s516 = sld [smem:[#allocation3 + $0x83]]
        %s517 = sld [smem:[#allocation3 + $0x84]]
        %s518 = sld [smem:[#allocation3 + $0x85]]
        %s519 = sld [smem:[#allocation3 + $0x86]]
        %s520 = sld [smem:[#allocation3 + $0x87]]
        %s521 = sld [smem:[#allocation3 + $0x88]]
        %s522 = sld [smem:[#allocation3 + $0x89]]
        %s523 = sld [smem:[#allocation3 + $0x100]]
        %s524 = sld [smem:[#allocation3 + $0x101]]
        %s525 = sld [smem:[#allocation3 + $0x102]]
        %s526 = sld [smem:[#allocation3 + $0x103]]
        %s527 = sld [smem:[#allocation3 + $0x104]]
        %s528 = sld [smem:[#allocation3 + $0x105]]
        %s529 = sld [smem:[#allocation3 + $0x106]]
        %s530 = sld [smem:[#allocation3 + $0x107]]
        %s531 = sld [smem:[#allocation3 + $0x108]]
        %s532 = sld [smem:[#allocation3 + $0x109]]
        %s533 = sld [smem:[#allocation3 + $0x180]]
        %s534 = sld [smem:[#allocation3 + $0x181]]
        %s535 = sld [smem:[#allocation3 + $0x182]]
        %s536 = sld [smem:[#allocation3 + $0x183]]
        %s537 = sld [smem:[#allocation3 + $0x184]]
        %s538 = sld [smem:[#allocation3 + $0x185]]
        %s539 = sld [smem:[#allocation3 + $0x186]]
        %s540 = sld [smem:[#allocation3 + $0x187]]
        %s541 = sld [smem:[#allocation3 + $0x188]]
        %s542 = sld [smem:[#allocation3 + $0x189]]
        %s543 = sld [smem:[#allocation3 + $0x200]]
        %s544 = sld [smem:[#allocation3 + $0x201]]
        %s545 = sld [smem:[#allocation3 + $0x202]]
        %s546 = sld [smem:[#allocation3 + $0x203]]
        %s547 = sld [smem:[#allocation3 + $0x204]]
        %s548 = sld [smem:[#allocation3 + $0x205]]
        %s549 = sld [smem:[#allocation3 + $0x206]]
        %s550 = sld [smem:[#allocation3 + $0x207]]
        %s551 = sld [smem:[#allocation3 + $0x208]]
        %s552 = sld [smem:[#allocation3 + $0x209]]
        %s553 = sld [smem:[#allocation5]]
        %s554 = sld [smem:[#allocation5 + $0x1]]
        %s555 = sld [smem:[#allocation5 + $0x2]]
        %s556 = sld [smem:[#allocation5 + $0x3]]
        %s557 = sld [smem:[#allocation5 + $0x4]]
        %s558 = sld [smem:[#allocation7]]
        %s559 = sld [smem:[#allocation7 + $0x1]]
        %s560 = sld [smem:[#allocation7 + $0x2]]
        %s561 = sld [smem:[#allocation7 + $0x3]]
        %s562 = sld [smem:[#allocation7 + $0x4]]
        %s563 = sld [smem:[#allocation7 + $0x80]]
        %s564 = sld [smem:[#allocation7 + $0x81]]
        %s565 = sld [smem:[#allocation7 + $0x82]]
        %s566 = sld [smem:[#allocation7 + $0x83]]
        %s567 = sld [smem:[#allocation7 + $0x84]]
        %s568 = sld [smem:[#allocation8]]
        %s569 = sld [smem:[#allocation8 + $0x1]]
        %v570 = vld [vmem:[%s452] sm:$0xff]
        %v571 = vld [vmem:[%s452 + $0x8] sm:$0xff]
        %v572 = vstv %s503
        %v573 = vmul.f32 %v572, %v570
        %v574 = vmul.f32 %v572, %v571
        %v575 = vstv %s513
        %v576 = vmul.f32 %v575, %v570
        %v577 = vmul.f32 %v575, %v571
        %v578 = vstv %s523
        %v579 = vmul.f32 %v578, %v570
        %v580 = vmul.f32 %v578, %v571
        %v581 = vstv %s533
        %v582 = vmul.f32 %v581, %v570
        %v583 = vmul.f32 %v581, %v571
        %v584 = vstv %s543
        %v585 = vmul.f32 %v584, %v570
        %v586 = vmul.f32 %v584, %v571
        %s587 = sadd.s32 0, 16
        %s588 = scalar_lea.vmem %s452, %s587 [#allocation2]
        %v589 = vld [vmem:[%s588] sm:$0xff]
        %v590 = vld [vmem:[%s588 + $0x8] sm:$0xff]
        %v591 = vstv %s504
        %v592 = vmul.f32 %v591, %v589
        %v593 = vmul.f32 %v591, %v590
        %v594 = vadd.f32 %v573, %v592
        %v595 = vadd.f32 %v574, %v593
        %v596 = vstv %s514
        %v597 = vmul.f32 %v596, %v589
        %v598 = vmul.f32 %v596, %v590
        %v599 = vadd.f32 %v576, %v597
        %v600 = vadd.f32 %v577, %v598
        %v601 = vstv %s524
        %v602 = vmul.f32 %v601, %v589
        %v603 = vmul.f32 %v601, %v590
        %v604 = vadd.f32 %v579, %v602
        %v605 = vadd.f32 %v580, %v603
        %v606 = vstv %s534
        %v607 = vmul.f32 %v606, %v589
        %v608 = vmul.f32 %v606, %v590
        %v609 = vadd.f32 %v582, %v607
        %v610 = vadd.f32 %v583, %v608
        %v611 = vstv %s544
        %v612 = vmul.f32 %v611, %v589
        %v613 = vmul.f32 %v611, %v590
        %v614 = vadd.f32 %v585, %v612
        %v615 = vadd.f32 %v586, %v613
        %s616 = sadd.s32 0, 32
        %s617 = scalar_lea.vmem %s452, %s616 [#allocation2]
        %v618 = vld [vmem:[%s617] sm:$0xff]
        %v619 = vld [vmem:[%s617 + $0x8] sm:$0xff]
        %v620 = vstv %s505
        %v621 = vmul.f32 %v620, %v618
        %v622 = vmul.f32 %v620, %v619
        %v623 = vadd.f32 %v594, %v621
        %v624 = vadd.f32 %v595, %v622
        %v625 = vstv %s515
        %v626 = vmul.f32 %v625, %v618
        %v627 = vmul.f32 %v625, %v619
        %v628 = vadd.f32 %v599, %v626
        %v629 = vadd.f32 %v600, %v627
        %v630 = vstv %s525
        %v631 = vmul.f32 %v630, %v618
        %v632 = vmul.f32 %v630, %v619
        %v633 = vadd.f32 %v604, %v631
        %v634 = vadd.f32 %v605, %v632
        %v635 = vstv %s535
        %v636 = vmul.f32 %v635, %v618
        %v637 = vmul.f32 %v635, %v619
        %v638 = vadd.f32 %v609, %v636
        %v639 = vadd.f32 %v610, %v637
        %v640 = vstv %s545
        %v641 = vmul.f32 %v640, %v618
        %v642 = vmul.f32 %v640, %v619
        %v643 = vadd.f32 %v614, %v641
        %v644 = vadd.f32 %v615, %v642
        %s645 = sadd.s32 0, 48
        %s646 = scalar_lea.vmem %s452, %s645 [#allocation2]
        %v647 = vld [vmem:[%s646] sm:$0xff]
        %v648 = vld [vmem:[%s646 + $0x8] sm:$0xff]
        %v649 = vstv %s506
        %v650 = vmul.f32 %v649, %v647
        %v651 = vmul.f32 %v649, %v648
        %v652 = vadd.f32 %v623, %v650
        %v653 = vadd.f32 %v624, %v651
        %v654 = vstv %s516
        %v655 = vmul.f32 %v654, %v647
        %v656 = vmul.f32 %v654, %v648
        %v657 = vadd.f32 %v628, %v655
        %v658 = vadd.f32 %v629, %v656
        %v659 = vstv %s526
        %v660 = vmul.f32 %v659, %v647
        %v661 = vmul.f32 %v659, %v648
        %v662 = vadd.f32 %v633, %v660
        %v663 = vadd.f32 %v634, %v661
        %v664 = vstv %s536
        %v665 = vmul.f32 %v664, %v647
        %v666 = vmul.f32 %v664, %v648
        %v667 = vadd.f32 %v638, %v665
        %v668 = vadd.f32 %v639, %v666
        %v669 = vstv %s546
        %v670 = vmul.f32 %v669, %v647
        %v671 = vmul.f32 %v669, %v648
        %v672 = vadd.f32 %v643, %v670
        %v673 = vadd.f32 %v644, %v671
        %s674 = sadd.s32 0, 64
        %s675 = scalar_lea.vmem %s452, %s674 [#allocation2]
        %v676 = vld [vmem:[%s675] sm:$0xff]
        %v677 = vld [vmem:[%s675 + $0x8] sm:$0xff]
        %v678 = vstv %s507
        %v679 = vmul.f32 %v678, %v676
        %v680 = vmul.f32 %v678, %v677
        %v681 = vadd.f32 %v652, %v679
        %v682 = vadd.f32 %v653, %v680
        %v683 = vstv %s517
        %v684 = vmul.f32 %v683, %v676
        %v685 = vmul.f32 %v683, %v677
        %v686 = vadd.f32 %v657, %v684
        %v687 = vadd.f32 %v658, %v685
        %v688 = vstv %s527
        %v689 = vmul.f32 %v688, %v676
        %v690 = vmul.f32 %v688, %v677
        %v691 = vadd.f32 %v662, %v689
        %v692 = vadd.f32 %v663, %v690
        %v693 = vstv %s537
        %v694 = vmul.f32 %v693, %v676
        %v695 = vmul.f32 %v693, %v677
        %v696 = vadd.f32 %v667, %v694
        %v697 = vadd.f32 %v668, %v695
        %v698 = vstv %s547
        %v699 = vmul.f32 %v698, %v676
        %v700 = vmul.f32 %v698, %v677
        %v701 = vadd.f32 %v672, %v699
        %v702 = vadd.f32 %v673, %v700
        %s703 = sadd.s32 0, 80
        %s704 = scalar_lea.vmem %s452, %s703 [#allocation2]
        %v705 = vld [vmem:[%s704] sm:$0xff]
        %v706 = vld [vmem:[%s704 + $0x8] sm:$0xff]
        %v707 = vstv %s508
        %v708 = vmul.f32 %v707, %v705
        %v709 = vmul.f32 %v707, %v706
        %v710 = vadd.f32 %v681, %v708
        %v711 = vadd.f32 %v682, %v709
        %v712 = vstv %s518
        %v713 = vmul.f32 %v712, %v705
        %v714 = vmul.f32 %v712, %v706
        %v715 = vadd.f32 %v686, %v713
        %v716 = vadd.f32 %v687, %v714
        %v717 = vstv %s528
        %v718 = vmul.f32 %v717, %v705
        %v719 = vmul.f32 %v717, %v706
        %v720 = vadd.f32 %v691, %v718
        %v721 = vadd.f32 %v692, %v719
        %v722 = vstv %s538
        %v723 = vmul.f32 %v722, %v705
        %v724 = vmul.f32 %v722, %v706
        %v725 = vadd.f32 %v696, %v723
        %v726 = vadd.f32 %v697, %v724
        %v727 = vstv %s548
        %v728 = vmul.f32 %v727, %v705
        %v729 = vmul.f32 %v727, %v706
        %v730 = vadd.f32 %v701, %v728
        %v731 = vadd.f32 %v702, %v729
        %s732 = sadd.s32 0, 96
        %s733 = scalar_lea.vmem %s452, %s732 [#allocation2]
        %v734 = vld [vmem:[%s733] sm:$0xff]
        %v735 = vld [vmem:[%s733 + $0x8] sm:$0xff]
        %v736 = vstv %s509
        %v737 = vmul.f32 %v736, %v734
        %v738 = vmul.f32 %v736, %v735
        %v739 = vadd.f32 %v710, %v737
        %v740 = vadd.f32 %v711, %v738
        %v741 = vstv %s519
        %v742 = vmul.f32 %v741, %v734
        %v743 = vmul.f32 %v741, %v735
        %v744 = vadd.f32 %v715, %v742
        %v745 = vadd.f32 %v716, %v743
        %v746 = vstv %s529
        %v747 = vmul.f32 %v746, %v734
        %v748 = vmul.f32 %v746, %v735
        %v749 = vadd.f32 %v720, %v747
        %v750 = vadd.f32 %v721, %v748
        %v751 = vstv %s539
        %v752 = vmul.f32 %v751, %v734
        %v753 = vmul.f32 %v751, %v735
        %v754 = vadd.f32 %v725, %v752
        %v755 = vadd.f32 %v726, %v753
        %v756 = vstv %s549
        %v757 = vmul.f32 %v756, %v734
        %v758 = vmul.f32 %v756, %v735
        %v759 = vadd.f32 %v730, %v757
        %v760 = vadd.f32 %v731, %v758
        %s761 = sadd.s32 0, 112
        %s762 = scalar_lea.vmem %s452, %s761 [#allocation2]
        %v763 = vld [vmem:[%s762] sm:$0xff]
        %v764 = vld [vmem:[%s762 + $0x8] sm:$0xff]
        %v765 = vstv %s510
        %v766 = vmul.f32 %v765, %v763
        %v767 = vmul.f32 %v765, %v764
        %v768 = vadd.f32 %v739, %v766
        %v769 = vadd.f32 %v740, %v767
        %v770 = vstv %s520
        %v771 = vmul.f32 %v770, %v763
        %v772 = vmul.f32 %v770, %v764
        %v773 = vadd.f32 %v744, %v771
        %v774 = vadd.f32 %v745, %v772
        %v775 = vstv %s530
        %v776 = vmul.f32 %v775, %v763
        %v777 = vmul.f32 %v775, %v764
        %v778 = vadd.f32 %v749, %v776
        %v779 = vadd.f32 %v750, %v777
        %v780 = vstv %s540
        %v781 = vmul.f32 %v780, %v763
        %v782 = vmul.f32 %v780, %v764
        %v783 = vadd.f32 %v754, %v781
        %v784 = vadd.f32 %v755, %v782
        %v785 = vstv %s550
        %v786 = vmul.f32 %v785, %v763
        %v787 = vmul.f32 %v785, %v764
        %v788 = vadd.f32 %v759, %v786
        %v789 = vadd.f32 %v760, %v787
        %s790 = sadd.s32 0, 128
        %s791 = scalar_lea.vmem %s452, %s790 [#allocation2]
        %v792 = vld [vmem:[%s791] sm:$0xff]
        %v793 = vld [vmem:[%s791 + $0x8] sm:$0xff]
        %v794 = vstv %s511
        %v795 = vmul.f32 %v794, %v792
        %v796 = vmul.f32 %v794, %v793
        %v797 = vadd.f32 %v768, %v795
        %v798 = vadd.f32 %v769, %v796
        %v799 = vstv %s521
        %v800 = vmul.f32 %v799, %v792
        %v801 = vmul.f32 %v799, %v793
        %v802 = vadd.f32 %v773, %v800
        %v803 = vadd.f32 %v774, %v801
        %v804 = vstv %s531
        %v805 = vmul.f32 %v804, %v792
        %v806 = vmul.f32 %v804, %v793
        %v807 = vadd.f32 %v778, %v805
        %v808 = vadd.f32 %v779, %v806
        %v809 = vstv %s541
        %v810 = vmul.f32 %v809, %v792
        %v811 = vmul.f32 %v809, %v793
        %v812 = vadd.f32 %v783, %v810
        %v813 = vadd.f32 %v784, %v811
        %v814 = vstv %s551
        %v815 = vmul.f32 %v814, %v792
        %v816 = vmul.f32 %v814, %v793
        %v817 = vadd.f32 %v788, %v815
        %v818 = vadd.f32 %v789, %v816
        %s819 = sadd.s32 0, 144
        %s820 = scalar_lea.vmem %s452, %s819 [#allocation2]
        %v821 = vld [vmem:[%s820] sm:$0xff]
        %v822 = vld [vmem:[%s820 + $0x8] sm:$0xff]
        %v823 = vstv %s512
        %v824 = vmul.f32 %v823, %v821
        %v825 = vmul.f32 %v823, %v822
        %v826 = vadd.f32 %v797, %v824
        %v827 = vadd.f32 %v798, %v825
        %v828 = vstv %s522
        %v829 = vmul.f32 %v828, %v821
        %v830 = vmul.f32 %v828, %v822
        %v831 = vadd.f32 %v802, %v829
        %v832 = vadd.f32 %v803, %v830
        %v833 = vstv %s532
        %v834 = vmul.f32 %v833, %v821
        %v835 = vmul.f32 %v833, %v822
        %v836 = vadd.f32 %v807, %v834
        %v837 = vadd.f32 %v808, %v835
        %v838 = vstv %s542
        %v839 = vmul.f32 %v838, %v821
        %v840 = vmul.f32 %v838, %v822
        %v841 = vadd.f32 %v812, %v839
        %v842 = vadd.f32 %v813, %v840
        %v843 = vstv %s552
        %v844 = vmul.f32 %v843, %v821
        %v845 = vmul.f32 %v843, %v822
        %v846 = vadd.f32 %v817, %v844
        %v847 = vadd.f32 %v818, %v845
        %v848 = vstv %s553
        %v849 = vadd.f32 %v826, %v848
        %v850 = vadd.f32 %v827, %v848
        %v851 = vmax.f32 %v849, 0.0
        %v852 = vmax.f32 %v850, 0.0
        %v853 = vstv %s554
        %v854 = vadd.f32 %v831, %v853
        %v855 = vadd.f32 %v832, %v853
        %v856 = vmax.f32 %v854, 0.0
        %v857 = vmax.f32 %v855, 0.0
        %v858 = vstv %s555
        %v859 = vadd.f32 %v836, %v858
        %v860 = vadd.f32 %v837, %v858
        %v861 = vmax.f32 %v859, 0.0
        %v862 = vmax.f32 %v860, 0.0
        %v863 = vstv %s556
        %v864 = vadd.f32 %v841, %v863
        %v865 = vadd.f32 %v842, %v863
        %v866 = vmax.f32 %v864, 0.0
        %v867 = vmax.f32 %v865, 0.0
        %v868 = vstv %s557
        %v869 = vadd.f32 %v846, %v868
        %v870 = vadd.f32 %v847, %v868
        %v871 = vmax.f32 %v869, 0.0
        %v872 = vmax.f32 %v870, 0.0
        %v873 = vstv %s558
        %v874 = vmul.f32 %v873, %v851
        %v875 = vmul.f32 %v873, %v852
        %v876 = vstv %s559
        %v877 = vmul.f32 %v876, %v856
        %v878 = vmul.f32 %v876, %v857
        %v879 = vadd.f32 %v874, %v877
        %v880 = vadd.f32 %v875, %v878
        %v881 = vstv %s560
        %v882 = vmul.f32 %v881, %v861
        %v883 = vmul.f32 %v881, %v862
        %v884 = vadd.f32 %v879, %v882
        %v885 = vadd.f32 %v880, %v883
        %v886 = vstv %s561
        %v887 = vmul.f32 %v886, %v866
        %v888 = vmul.f32 %v886, %v867
        %v889 = vadd.f32 %v884, %v887
        %v890 = vadd.f32 %v885, %v888
        %v891 = vstv %s562
        %v892 = vmul.f32 %v891, %v871
        %v893 = vmul.f32 %v891, %v872
        %v894 = vadd.f32 %v889, %v892
        %v895 = vadd.f32 %v890, %v893
        %v896 = vstv %s568
        %v897 = vadd.f32 %v894, %v896
        %v898 = vadd.f32 %v895, %v896
        %899 = vst [vmem:[%s492] sm:$0xff] %v897
        %900 = vst [vmem:[%s492 + $0x8] sm:$0xff] %v898
        %v901 = vstv %s563
        %v902 = vmul.f32 %v901, %v851
        %v903 = vmul.f32 %v901, %v852
        %v904 = vstv %s564
        %v905 = vmul.f32 %v904, %v856
        %v906 = vmul.f32 %v904, %v857
        %v907 = vadd.f32 %v902, %v905
        %v908 = vadd.f32 %v903, %v906
        %v909 = vstv %s565
        %v910 = vmul.f32 %v909, %v861
        %v911 = vmul.f32 %v909, %v862
        %v912 = vadd.f32 %v907, %v910
        %v913 = vadd.f32 %v908, %v911
        %v914 = vstv %s566
        %v915 = vmul.f32 %v914, %v866
        %v916 = vmul.f32 %v914, %v867
        %v917 = vadd.f32 %v912, %v915
        %v918 = vadd.f32 %v913, %v916
        %v919 = vstv %s567
        %v920 = vmul.f32 %v919, %v871
        %v921 = vmul.f32 %v919, %v872
        %v922 = vadd.f32 %v917, %v920
        %v923 = vadd.f32 %v918, %v921
        %v924 = vstv %s569
        %v925 = vadd.f32 %v922, %v924
        %v926 = vadd.f32 %v923, %v924
        %s927 = scalar_lea.vmem %s492, %s587 [#allocation10]
        %928 = vst [vmem:[%s927] sm:$0xff] %v925
        %929 = vst [vmem:[%s927 + $0x8] sm:$0xff] %v926
        %s930 = sand.u32 %s137, 1
        %s931 = sand.u32 %s137, 1
        %s932 = smul.addr %s931, 32
        %s933 = scalar_lea.vmem [#allocation10], %s932
        // Predicated region
        $region109: #{_lambda_.1} parent=87 // pred_check
          %p934 = pneg %p147
        $region110: #{_lambda_.1} parent=87 // pred_check_branch
          %936 = sbr.rel (%p934) target = $region112
        $region111: #{_lambda_.1} parent=87 // pred_region
          %s937 = smul.u32 2, %s19
          %s938 = ssub.s32 3, %s937
          %p939 = scmp.lt.s32.totalorder %s938, 2
          %s940 = scalar_select %p939, %s938, 2
          %s941 = smul.u32 256, %s940
          %p942 = scmp.ne.s32.totalorder 0, %s941
          %s943 = smul.addr %s937, 8
          %s944 = scalar_lea.vmem %s5, %s943
          // Predicated region
          $region113: #{_lambda_.1} parent=111 // pred_check
            %p945 = pneg %p942
          $region114: #{_lambda_.1} parent=111 // pred_check_branch
            %947 = sbr.rel (%p945) target = $region116
          $region115: #{_lambda_.1} parent=111 // pred_region
            // Predicated region
            $region117: #{_lambda_.1} parent=115 // pred_check
              _
            $region118: #{_lambda_.1} parent=115 // pred_check_branch
              %949 = sbr.rel (0) target = $region120
            $region119: #{_lambda_.1} parent=115 // pred_region
              // Predicated region
              $region139: #{_lambda_.1} parent=119 // pred_check
                _
              $region140: #{_lambda_.1} parent=119 // pred_check_branch
                %1007 = sbr.rel (0) target = $region142
              $region141: #{_lambda_.1} parent=119 // pred_region
                %s1008 = sshrl.u32 %s940, 1
                // While loop
                $region143: #{_lambda_.1} parent=141 // loop_pre_header
                  _
                $region144: #{_lambda_.1} parent=141 // loop_header
                  %s1010 = sphi 0, %s1012
                  %p1011 = scmp.ge.s32.totalorder %s1010, %s1008
                  %s1015 = sphi 0, %s1028
                  %s1016 = sphi %s933, %s1031
                  %s1017 = sphi %s944, %s1032
                $region145: #{_lambda_.1} parent=141 // loop_header_branch
                  %1014 = sbr.rel (%p1011) target = $region149
                $region146: #{_lambda_.1} parent=141 // loop_body
                  %v1018 = vld [vmem:[%s1016] sm:$0xff]
                  %1019 = vst [vmem:[%s1017] sm:$0xff] %v1018
                  %v1020 = vld [vmem:[%s1016 + $0x8] sm:$0xff]
                  %1021 = vst [vmem:[%s1017 + $0x8] sm:$0xff] %v1020
                  %v1022 = vld [vmem:[%s1016 + $0x10] sm:$0xff]
                  %1023 = vst [vmem:[%s1017 + $0x18] sm:$0xff] %v1022
                  %v1024 = vld [vmem:[%s1016 + $0x18] sm:$0xff]
                  %1025 = vst [vmem:[%s1017 + $0x20] sm:$0xff] %v1024
                  %s1026 = sadd.s32 1, %s1015
                  %p1027 = scmp.ge.s32.totalorder %s1026, %s1008
                  %s1028 = scalar_select %p1027, 0, %s1026
                  %s1029 = smul.u32 %s1028, 16
                  %s1030 = smul.u32 %s1028, 16
                  %s1031 = scalar_lea.vmem %s933, %s1029 [#allocation10]
                  %s1032 = scalar_lea.vmem %s944, %s1030
                $region147: #{_lambda_.1} parent=141 // loop_footer
                  %s1012 = sadd.s32 %s1010, 1
                $region148: #{_lambda_.1} parent=141 // loop_footer_branch
                  %1009 = sbr.rel target = $region144
                $region149: #{_lambda_.1} parent=141 // loop_exit
                  _
                %s1033 = sshrl.u32 %s940, 1
                %s1034 = sand.u32 %s940, 1
                %s1035 = smul.u32 %s1033, 2
                %s1036 = smul.u32 8, %s1035
                %s1037 = scalar_lea.vmem %s933, %s1036 [#allocation10]
                %s1038 = smul.u32 8, %s1035
                %s1039 = scalar_lea.vmem %s944, %s1038
                // While loop
                $region150: #{_lambda_.1} parent=141 // loop_pre_header
                  _
                $region151: #{_lambda_.1} parent=141 // loop_header
                  %s1041 = sphi 0, %s1043
                  %p1042 = scmp.ge.s32.totalorder %s1041, %s1034
                  %s1046 = sphi 0, %s1055
                  %s1047 = sphi %s1037, %s1058
                  %s1048 = sphi %s1039, %s1059
                $region152: #{_lambda_.1} parent=141 // loop_header_branch
                  %1045 = sbr.rel (%p1042) target = $region156
                $region153: #{_lambda_.1} parent=141 // loop_body
                  %v1049 = vld [vmem:[%s1047] sm:$0xff]
                  %1050 = vst [vmem:[%s1048] sm:$0xff] %v1049
                  %v1051 = vld [vmem:[%s1047 + $0x10] sm:$0xff]
                  %1052 = vst [vmem:[%s1048 + $0x18] sm:$0xff] %v1051
                  %s1053 = sadd.s32 1, %s1046
                  %p1054 = scmp.ge.s32.totalorder %s1053, %s1034
                  %s1055 = scalar_select %p1054, 0, %s1053
                  %s1056 = smul.u32 %s1055, 8
                  %s1057 = smul.u32 %s1055, 8
                  %s1058 = scalar_lea.vmem %s1037, %s1056 [#allocation10]
                  %s1059 = scalar_lea.vmem %s1039, %s1057
                $region154: #{_lambda_.1} parent=141 // loop_footer
                  %s1043 = sadd.s32 %s1041, 1
                $region155: #{_lambda_.1} parent=141 // loop_footer_branch
                  %1040 = sbr.rel target = $region151
                $region156: #{_lambda_.1} parent=141 // loop_exit
                  _
              $region142: #{_lambda_.1} parent=119 // pred_fallthru
                _
              // Predicated region
              $region157: #{_lambda_.1} parent=119 // pred_check
                _
              $region158: #{_lambda_.1} parent=119 // pred_check_branch
                %1061 = sbr.rel target = $region160
              $region159: #{_lambda_.1} parent=119 // pred_region
                _
              $region160: #{_lambda_.1} parent=119 // pred_fallthru
                _
            $region120: #{_lambda_.1} parent=115 // pred_fallthru
              _
            // Predicated region
            $region121: #{_lambda_.1} parent=115 // pred_check
              _
            $region122: #{_lambda_.1} parent=115 // pred_check_branch
              %951 = sbr.rel target = $region124
            $region123: #{_lambda_.1} parent=115 // pred_region
              %s953 = ssub.s32 256, 1
              %s954 = sshrl.u32 %s940, 1
              // While loop
              $region125: #{_lambda_.1} parent=123 // loop_pre_header
                _
              $region126: #{_lambda_.1} parent=123 // loop_header
                %s956 = sphi 0, %s958
                %p957 = scmp.ge.s32.totalorder %s956, %s954
                %s961 = sphi 0, %s974
                %s962 = sphi %s933, %s977
                %s963 = sphi %s944, %s978
              $region127: #{_lambda_.1} parent=123 // loop_header_branch
                %960 = sbr.rel (%p957) target = $region131
              $region128: #{_lambda_.1} parent=123 // loop_body
                %v964 = vld [vmem:[%s962] sm:%s953]
                %965 = vst [vmem:[%s963] sm:%s953] %v964
                %v966 = vld [vmem:[%s962 + $0x8] sm:%s953]
                %967 = vst [vmem:[%s963 + $0x8] sm:%s953] %v966
                %v968 = vld [vmem:[%s962 + $0x10] sm:%s953]
                %969 = vst [vmem:[%s963 + $0x18] sm:%s953] %v968
                %v970 = vld [vmem:[%s962 + $0x18] sm:%s953]
                %971 = vst [vmem:[%s963 + $0x20] sm:%s953] %v970
                %s972 = sadd.s32 1, %s961
                %p973 = scmp.ge.s32.totalorder %s972, %s954
                %s974 = scalar_select %p973, 0, %s972
                %s975 = smul.u32 %s974, 16
                %s976 = smul.u32 %s974, 16
                %s977 = scalar_lea.vmem %s933, %s975 [#allocation10]
                %s978 = scalar_lea.vmem %s944, %s976
              $region129: #{_lambda_.1} parent=123 // loop_footer
                %s958 = sadd.s32 %s956, 1
              $region130: #{_lambda_.1} parent=123 // loop_footer_branch
                %955 = sbr.rel target = $region126
              $region131: #{_lambda_.1} parent=123 // loop_exit
                _
              %s979 = sshrl.u32 %s940, 1
              %s980 = sand.u32 %s940, 1
              %s981 = smul.u32 %s979, 2
              %s982 = smul.u32 8, %s981
              %s983 = scalar_lea.vmem %s933, %s982 [#allocation10]
              %s984 = smul.u32 8, %s981
              %s985 = scalar_lea.vmem %s944, %s984
              // While loop
              $region132: #{_lambda_.1} parent=123 // loop_pre_header
                _
              $region133: #{_lambda_.1} parent=123 // loop_header
                %s987 = sphi 0, %s989
                %p988 = scmp.ge.s32.totalorder %s987, %s980
                %s992 = sphi 0, %s1001
                %s993 = sphi %s983, %s1004
                %s994 = sphi %s985, %s1005
              $region134: #{_lambda_.1} parent=123 // loop_header_branch
                %991 = sbr.rel (%p988) target = $region138
              $region135: #{_lambda_.1} parent=123 // loop_body
                %v995 = vld [vmem:[%s993] sm:%s953]
                %996 = vst [vmem:[%s994] sm:%s953] %v995
                %v997 = vld [vmem:[%s993 + $0x10] sm:%s953]
                %998 = vst [vmem:[%s994 + $0x18] sm:%s953] %v997
                %s999 = sadd.s32 1, %s992
                %p1000 = scmp.ge.s32.totalorder %s999, %s980
                %s1001 = scalar_select %p1000, 0, %s999
                %s1002 = smul.u32 %s1001, 8
                %s1003 = smul.u32 %s1001, 8
                %s1004 = scalar_lea.vmem %s983, %s1002 [#allocation10]
                %s1005 = scalar_lea.vmem %s985, %s1003
              $region136: #{_lambda_.1} parent=123 // loop_footer
                %s989 = sadd.s32 %s987, 1
              $region137: #{_lambda_.1} parent=123 // loop_footer_branch
                %986 = sbr.rel target = $region133
              $region138: #{_lambda_.1} parent=123 // loop_exit
                _
            $region124: #{_lambda_.1} parent=115 // pred_fallthru
              _
          $region116: #{_lambda_.1} parent=111 // pred_fallthru
            _
          %1062 = vnop
        $region112: #{_lambda_.1} parent=87 // pred_fallthru
          _
      $region88: #{_lambda_.1} parent=5 // pred_fallthru
        _
      %p1063 = scmp.le.s32.totalorder 2, %s14
      // Predicated region
      $region161: #{_lambda_.1} parent=5 // pred_check
        %p1064 = pneg %p1063
      $region162: #{_lambda_.1} parent=5 // pred_check_branch
        %1066 = sbr.rel (%p1064) target = $region164
      $region163: #{_lambda_.1} parent=5 // pred_region
        %s1067 = ssub.s32 %s14, 2
        // Predicated region
        $region165: #{_lambda_.1} parent=163 // pred_check
          %p1068 = pneg %p153
        $region166: #{_lambda_.1} parent=163 // pred_check_branch
          %1070 = sbr.rel (%p1068) target = $region168
        $region167: #{_lambda_.1} parent=163 // pred_region
          %s1071 = sand.u32 %s138, 1
          %s1072 = sand.u32 %s138, 1
          %s1073 = smul.addr %s1072, 32
          %s1074 = scalar_lea.vmem [#allocation10], %s1073
        $region168: #{_lambda_.1} parent=163 // pred_fallthru
          _
      $region164: #{_lambda_.1} parent=5 // pred_fallthru
        _
    $region6: #{_lambda_.1} parent=1 // loop_footer
      %s18 = sadd.s32 1, %s14
    $region7: #{_lambda_.1} parent=1 // loop_footer_branch
      %13 = sbr.rel target = $region3
    $region8: #{_lambda_.1} parent=1 // loop_exit
      _
    %1075 = vsyncpa [#allocation4], 1
    %s1076 = scalar_lea.sflag [#allocation4], 1
    %1077 = vsyncpa %s1076, 1
    %1078 = vsyncpa [#allocation6], 1
    %1079 = vsyncpa [#allocation9], 1

</llo_original>
